<compile_context>
chip_gen: v7x
topology: tpu7x:2x2x1
jax: 0.10.0
libtpu: 0.0.40
codegen_flags: <defaults>
</compile_context>

<pallas_src>
import jax
import jax.numpy as jnp
from jax.experimental import pallas as pl
from jax.experimental.pallas import tpu as pltpu

IN_DIM = 28 * 28   # 784
H1_DIM = 128
H2_DIM = 64
OUT_DIM = 10

TARGET_GRID_STEPS = 4   # >=2 for v7x megacore, >=4 for DMA/compute overlap


def mlp_kernel(x_ref, w1_ref, b1_ref, w2_ref, b2_ref, w3_ref, b3_ref, o_ref):
    x = x_ref[...]                                              # (TB, 784) bf16

    # fc1 + ReLU  (bf16 x bf16 -> f32 on the MXU)
    h1 = jnp.dot(x, w1_ref[...], preferred_element_type=jnp.float32)
    h1 = jnp.maximum(h1 + b1_ref[...], 0.0)                     # (TB, 128) f32

    # fc2 + ReLU
    h2 = jnp.dot(h1.astype(jnp.bfloat16), w2_ref[...],
                 preferred_element_type=jnp.float32)
    h2 = jnp.maximum(h2 + b2_ref[...], 0.0)                     # (TB, 64) f32

    # fc3 (logits)
    logits = jnp.dot(h2.astype(jnp.bfloat16), w3_ref[...],
                     preferred_element_type=jnp.float32)
    logits = logits + b3_ref[...]                               # (TB, 10) f32

    # log_softmax over dim=1 (numerically stable), all f32.
    m = jnp.max(logits, axis=-1, keepdims=True)
    shifted = logits - m
    lse = jnp.log(jnp.sum(jnp.exp(shifted), axis=-1, keepdims=True))
    o_ref[...] = (shifted - lse).astype(o_ref.dtype)


def _round_up(v, m):
    return ((v + m - 1) // m) * m


def _pick_batch_tile(batch, batch_tile):
    """Batch tile: aim for >= TARGET_GRID_STEPS grid steps, multiple of 8
    sublanes, capped at batch_tile (v7x scoped-VMEM-safe)."""
    tb = _round_up(pl.cdiv(batch, TARGET_GRID_STEPS), 8)
    tb = max(8, min(tb, batch_tile))
    if tb >= batch:
        # Single block covering the whole (small) batch; a block equal to the
        # full array dim is exempt from the multiple-of-8 sublane rule.
        return batch
    return tb


def _const_spec(shape, single_buffer):
    """BlockSpec for a grid-invariant (VMEM-resident) operand."""
    index_map = lambda i: (0,) * len(shape)
    if single_buffer:
        return pl.BlockSpec(shape, index_map, pipeline_mode=pl.Buffered(1))
    return pl.BlockSpec(shape, index_map)


def mlp_forward(x, params, *, batch_tile=2048):
    """x: any shape with trailing 28*28 elements per row (mimics x.view(-1, 784)).

    params: dict with
      w1 (784,128) bf16, b1 (1,128) f32,
      w2 (128, 64) bf16, b2 (1, 64) f32,
      w3 ( 64, 10) bf16, b3 (1, 10) f32.
    Weights are already (in, out) and bf16 -> zero layout work per call.
    """
    x = x.reshape(-1, IN_DIM)
    if x.dtype != jnp.bfloat16:
        # Producer should already emit bf16 (as the demo pipeline does); this
        # cast is a no-op in that case and only a fallback otherwise.
        x = x.astype(jnp.bfloat16)
    B = x.shape[0]

    tb = _pick_batch_tile(B, batch_tile)
    grid = (pl.cdiv(B, tb),)

    w1, b1 = params["w1"], params["b1"]
    w2, b2 = params["w2"], params["b2"]
    w3, b3 = params["w3"], params["b3"]

    flops = 2 * B * (IN_DIM * H1_DIM + H1_DIM * H2_DIM + H2_DIM * OUT_DIM)
    bytes_accessed = (
        x.size * 2                                    # bf16 x
        + (w1.size + w2.size + w3.size) * 2           # bf16 weights
        + (b1.size + b2.size + b3.size) * 4           # f32 biases
        + B * OUT_DIM * 4                             # f32 output
    )
    cost = pl.CostEstimate(
        flops=flops,
        transcendentals=B * (OUT_DIM + 1),            # exp per logit + log per row
        bytes_accessed=bytes_accessed,
    )

    def build_and_call(single_buffer_weights):
        in_specs = [
            pl.BlockSpec((tb, IN_DIM), lambda i: (i, 0)),        # x: tiled on batch
            _const_spec((IN_DIM, H1_DIM), single_buffer_weights),  # w1
            _const_spec((1, H1_DIM), single_buffer_weights),       # b1
            _const_spec((H1_DIM, H2_DIM), single_buffer_weights),  # w2
            _const_spec((1, H2_DIM), single_buffer_weights),       # b2
            _const_spec((H2_DIM, OUT_DIM), single_buffer_weights), # w3
            _const_spec((1, OUT_DIM), single_buffer_weights),      # b3
        ]
        return pl.pallas_call(
            mlp_kernel,
            out_shape=jax.ShapeDtypeStruct((B, OUT_DIM), jnp.float32),
            grid=grid,
            in_specs=in_specs,
            out_specs=pl.BlockSpec((tb, OUT_DIM), lambda i: (i, 0)),
            compiler_params=pltpu.CompilerParams(
                dimension_semantics=("parallel",),
            ),
            cost_estimate=cost,
        )(x, w1, b1, w2, b2, w3, b3)

    try:
        # Preferred: single-buffered grid-invariant weights (reclaims ~0.5 MB VMEM).
        return build_and_call(True)
    except Exception:
        # Fallback if this Pallas build rejects pl.Buffered(1).
        return build_and_call(False)


def init_params(key):
    """PyTorch-style uniform(-1/sqrt(fan_in), +1/sqrt(fan_in)) init.

    Stored kernel-ready: weights (in, out) in bf16, biases (1, out) in f32.
    """
    def layer(k, fan_in, fan_out):
        kw, kb = jax.random.split(k)
        bound = 1.0 / (fan_in ** 0.5)
        w = jax.random.uniform(kw, (fan_in, fan_out), jnp.float32, -bound, bound)
        b = jax.random.uniform(kb, (fan_out,), jnp.float32, -bound, bound)
        return w.astype(jnp.bfloat16), b.reshape(1, -1)

    k1, k2, k3 = jax.random.split(key, 3)
    w1, b1 = layer(k1, IN_DIM, H1_DIM)
    w2, b2 = layer(k2, H1_DIM, H2_DIM)
    w3, b3 = layer(k3, H2_DIM, OUT_DIM)
    return {"w1": w1, "b1": b1, "w2": w2, "b2": b2, "w3": w3, "b3": b3}


def ref_forward(x, params):
    """Plain-JAX reference with identical dtype policy (bf16 matmul, f32 acc)."""
    x = x.reshape(-1, IN_DIM).astype(jnp.bfloat16)
    h1 = jnp.dot(x, params["w1"], preferred_element_type=jnp.float32) + params["b1"]
    h1 = jnp.maximum(h1, 0.0)
    h2 = jnp.dot(h1.astype(jnp.bfloat16), params["w2"],
                 preferred_element_type=jnp.float32) + params["b2"]
    h2 = jnp.maximum(h2, 0.0)
    logits = jnp.dot(h2.astype(jnp.bfloat16), params["w3"],
                     preferred_element_type=jnp.float32) + params["b3"]
    return jax.nn.log_softmax(logits, axis=1)


if __name__ == "__main__":
    key = jax.random.PRNGKey(0)
    kx, kp = jax.random.split(key)

    # Small MNIST-like batch, flattened inside mlp_forward exactly like the
    # module's x.view(-1, 784). The input pipeline emits bf16 directly so the
    # kernel never pays an f32 x round trip. batch=32 -> tb=8 -> 4 grid steps,
    # exercising the multi-step pipelined path.
    batch = 32
    x_img = jax.random.normal(kx, (batch, 1, 28, 28), jnp.float32).astype(jnp.bfloat16)

    params = init_params(kp)

    out = mlp_forward(x_img, params)
    out = jax.block_until_ready(out)

    ref = ref_forward(x_img, params)

    assert out.shape == (batch, OUT_DIM)
    assert bool(jnp.all(jnp.isfinite(out))), "non-finite output"
    assert jnp.allclose(out, ref, atol=2e-4, rtol=2e-4), "mismatch vs reference"
    print("KERNEL_OK")
</pallas_src>

<mosaic_0001>
module attributes {stable_mosaic.version = 11 : i64} {
  func.func @mlp_kernel(%arg0: i32, %arg1: memref<8x784xbf16, #tpu.memory_space<vmem>>, %arg2: memref<784x128xbf16, #tpu.memory_space<vmem>>, %arg3: memref<1x128xf32, #tpu.memory_space<vmem>>, %arg4: memref<128x64xbf16, #tpu.memory_space<vmem>>, %arg5: memref<1x64xf32, #tpu.memory_space<vmem>>, %arg6: memref<64x10xbf16, #tpu.memory_space<vmem>>, %arg7: memref<1x10xf32, #tpu.memory_space<vmem>>, %arg8: memref<8x10xf32, #tpu.memory_space<vmem>>) attributes {dimension_semantics = [#tpu.dimension_semantics<parallel>], iteration_bounds = array<i64: 4>, scalar_prefetch = 0 : i64, scratch_operands = 0 : i64, tpu.core_type = #tpu.core_type<tc>, window_params = [{transform_indices = @transform_0, window_bounds = array<i64: 8, 784>}, {pipeline_mode = #tpu.pipeline_mode<synchronous>, transform_indices = @transform_1, window_bounds = array<i64: 784, 128>}, {pipeline_mode = #tpu.pipeline_mode<synchronous>, transform_indices = @transform_2, window_bounds = array<i64: 1, 128>}, {pipeline_mode = #tpu.pipeline_mode<synchronous>, transform_indices = @transform_3, window_bounds = array<i64: 128, 64>}, {pipeline_mode = #tpu.pipeline_mode<synchronous>, transform_indices = @transform_4, window_bounds = array<i64: 1, 64>}, {pipeline_mode = #tpu.pipeline_mode<synchronous>, transform_indices = @transform_5, window_bounds = array<i64: 64, 10>}, {pipeline_mode = #tpu.pipeline_mode<synchronous>, transform_indices = @transform_6, window_bounds = array<i64: 1, 10>}, {transform_indices = @transform_7, window_bounds = array<i64: 8, 10>}]} {
    %c0 = arith.constant 0 : index
    %c0_0 = arith.constant 0 : index
    %0 = vector.load %arg1[%c0, %c0_0] : memref<8x784xbf16, #tpu.memory_space<vmem>>, vector<8x784xbf16>
    %c0_1 = arith.constant 0 : index
    %c0_2 = arith.constant 0 : index
    %1 = vector.load %arg2[%c0_1, %c0_2] : memref<784x128xbf16, #tpu.memory_space<vmem>>, vector<784x128xbf16>
    %cst = arith.constant dense<0.000000e+00> : vector<8x128xf32>
    %2 = tpu.matmul %0, %1, %cst {dimension_numbers = #tpu.dot_dimension_numbers<[1], [0], [0], [1], [0, 0, 1, 1], [], []>} : vector<8x784xbf16>, vector<784x128xbf16>, vector<8x128xf32> -> vector<8x128xf32>
    %c0_3 = arith.constant 0 : index
    %c0_4 = arith.constant 0 : index
    %3 = vector.load %arg3[%c0_3, %c0_4] : memref<1x128xf32, #tpu.memory_space<vmem>>, vector<1x128xf32>
    %4 = vector.broadcast %3 : vector<1x128xf32> to vector<8x128xf32>
    %5 = arith.addf %2, %4 : vector<8x128xf32>
    %cst_5 = arith.constant 0.000000e+00 : f32
    %6 = vector.broadcast %cst_5 : f32 to vector<8x128xf32>
    %7 = arith.maximumf %5, %6 : vector<8x128xf32>
    %8 = arith.truncf %7 : vector<8x128xf32> to vector<8x128xbf16>
    %c0_6 = arith.constant 0 : index
    %c0_7 = arith.constant 0 : index
    %9 = vector.load %arg4[%c0_6, %c0_7] : memref<128x64xbf16, #tpu.memory_space<vmem>>, vector<128x64xbf16>
    %cst_8 = arith.constant dense<0.000000e+00> : vector<8x64xf32>
    %10 = tpu.matmul %8, %9, %cst_8 {dimension_numbers = #tpu.dot_dimension_numbers<[1], [0], [0], [1], [0, 0, 1, 1], [], []>} : vector<8x128xbf16>, vector<128x64xbf16>, vector<8x64xf32> -> vector<8x64xf32>
    %c0_9 = arith.constant 0 : index
    %c0_10 = arith.constant 0 : index
    %11 = vector.load %arg5[%c0_9, %c0_10] : memref<1x64xf32, #tpu.memory_space<vmem>>, vector<1x64xf32>
    %12 = vector.broadcast %11 : vector<1x64xf32> to vector<8x64xf32>
    %13 = arith.addf %10, %12 : vector<8x64xf32>
    %cst_11 = arith.constant 0.000000e+00 : f32
    %14 = vector.broadcast %cst_11 : f32 to vector<8x64xf32>
    %15 = arith.maximumf %13, %14 : vector<8x64xf32>
    %16 = arith.truncf %15 : vector<8x64xf32> to vector<8x64xbf16>
    %c0_12 = arith.constant 0 : index
    %c0_13 = arith.constant 0 : index
    %17 = vector.load %arg6[%c0_12, %c0_13] : memref<64x10xbf16, #tpu.memory_space<vmem>>, vector<64x10xbf16>
    %cst_14 = arith.constant dense<0.000000e+00> : vector<8x10xf32>
    %18 = tpu.matmul %16, %17, %cst_14 {dimension_numbers = #tpu.dot_dimension_numbers<[1], [0], [0], [1], [0, 0, 1, 1], [], []>} : vector<8x64xbf16>, vector<64x10xbf16>, vector<8x10xf32> -> vector<8x10xf32>
    %c0_15 = arith.constant 0 : index
    %c0_16 = arith.constant 0 : index
    %19 = vector.load %arg7[%c0_15, %c0_16] : memref<1x10xf32, #tpu.memory_space<vmem>>, vector<1x10xf32>
    %20 = vector.broadcast %19 : vector<1x10xf32> to vector<8x10xf32>
    %21 = arith.addf %18, %20 : vector<8x10xf32>
    %cst_17 = arith.constant dense<0xFF800000> : vector<8xf32>
    %22 = vector.multi_reduction <maximumf>, %21, %cst_17 [1] : vector<8x10xf32> to vector<8xf32>
    %23 = vector.shape_cast %22 : vector<8xf32> to vector<8x1xf32>
    %24 = vector.broadcast %23 : vector<8x1xf32> to vector<8x10xf32>
    %25 = arith.subf %21, %24 : vector<8x10xf32>
    %26 = math.exp %25 : vector<8x10xf32>
    %cst_18 = arith.constant dense<0.000000e+00> : vector<8xf32>
    %27 = vector.multi_reduction <add>, %26, %cst_18 [1] : vector<8x10xf32> to vector<8xf32>
    %28 = vector.shape_cast %27 : vector<8xf32> to vector<8x1xf32>
    %29 = math.log %28 : vector<8x1xf32>
    %30 = vector.broadcast %29 : vector<8x1xf32> to vector<8x10xf32>
    %31 = arith.subf %25, %30 : vector<8x10xf32>
    %c0_19 = arith.constant 0 : index
    %c0_20 = arith.constant 0 : index
    %32 = vector.load %arg8[%c0_19, %c0_20] : memref<8x10xf32, #tpu.memory_space<vmem>>, vector<8x10xf32>
    tpu.vector_store %arg8[%c0_19, %c0_20], %31 {strides = array<i32>} : memref<8x10xf32, #tpu.memory_space<vmem>>, vector<8x10xf32>,
    return
  }
  func.func @transform_0(%arg0: i32) -> (i32, i32) {
    %c0_i32 = arith.constant 0 : i32
    %c0_i32_0 = arith.constant 0 : i32
    return %arg0, %c0_i32 : i32, i32
  }
  func.func @transform_1(%arg0: i32) -> (i32, i32) {
    %c0_i32 = arith.constant 0 : i32
    %c0_i32_0 = arith.constant 0 : i32
    %c0_i32_1 = arith.constant 0 : i32
    return %c0_i32, %c0_i32_0 : i32, i32
  }
  func.func @transform_2(%arg0: i32) -> (i32, i32) {
    %c0_i32 = arith.constant 0 : i32
    %c0_i32_0 = arith.constant 0 : i32
    %c0_i32_1 = arith.constant 0 : i32
    return %c0_i32, %c0_i32_0 : i32, i32
  }
  func.func @transform_3(%arg0: i32) -> (i32, i32) {
    %c0_i32 = arith.constant 0 : i32
    %c0_i32_0 = arith.constant 0 : i32
    %c0_i32_1 = arith.constant 0 : i32
    return %c0_i32, %c0_i32_0 : i32, i32
  }
  func.func @transform_4(%arg0: i32) -> (i32, i32) {
    %c0_i32 = arith.constant 0 : i32
    %c0_i32_0 = arith.constant 0 : i32
    %c0_i32_1 = arith.constant 0 : i32
    return %c0_i32, %c0_i32_0 : i32, i32
  }
  func.func @transform_5(%arg0: i32) -> (i32, i32) {
    %c0_i32 = arith.constant 0 : i32
    %c0_i32_0 = arith.constant 0 : i32
    %c0_i32_1 = arith.constant 0 : i32
    return %c0_i32, %c0_i32_0 : i32, i32
  }
  func.func @transform_6(%arg0: i32) -> (i32, i32) {
    %c0_i32 = arith.constant 0 : i32
    %c0_i32_0 = arith.constant 0 : i32
    %c0_i32_1 = arith.constant 0 : i32
    return %c0_i32, %c0_i32_0 : i32, i32
  }
  func.func @transform_7(%arg0: i32) -> (i32, i32) {
    %c0_i32 = arith.constant 0 : i32
    %c0_i32_0 = arith.constant 0 : i32
    return %arg0, %c0_i32 : i32, i32
  }
}

module attributes {stable_mosaic.version = 11 : i64} {
  func.func @mlp_kernel(%arg0: i32, %arg1: memref<8x784xbf16, #tpu.memory_space<vmem>>, %arg2: memref<784x128xbf16, #tpu.memory_space<vmem>>, %arg3: memref<1x128xf32, #tpu.memory_space<vmem>>, %arg4: memref<128x64xbf16, #tpu.memory_space<vmem>>, %arg5: memref<1x64xf32, #tpu.memory_space<vmem>>, %arg6: memref<64x10xbf16, #tpu.memory_space<vmem>>, %arg7: memref<1x10xf32, #tpu.memory_space<vmem>>, %arg8: memref<8x10xf32, #tpu.memory_space<vmem>>) attributes {dimension_semantics = [#tpu.dimension_semantics<parallel>], iteration_bounds = array<i64: 4>, scalar_prefetch = 0 : i64, scratch_operands = 0 : i64, tpu.core_type = #tpu.core_type<tc>, window_params = [{transform_indices = @transform_0, window_bounds = array<i64: 8, 784>}, {pipeline_mode = #tpu.pipeline_mode<synchronous>, transform_indices = @transform_1, window_bounds = array<i64: 784, 128>}, {pipeline_mode = #tpu.pipeline_mode<synchronous>, transform_indices = @transform_2, window_bounds = array<i64: 1, 128>}, {pipeline_mode = #tpu.pipeline_mode<synchronous>, transform_indices = @transform_3, window_bounds = array<i64: 128, 64>}, {pipeline_mode = #tpu.pipeline_mode<synchronous>, transform_indices = @transform_4, window_bounds = array<i64: 1, 64>}, {pipeline_mode = #tpu.pipeline_mode<synchronous>, transform_indices = @transform_5, window_bounds = array<i64: 64, 10>}, {pipeline_mode = #tpu.pipeline_mode<synchronous>, transform_indices = @transform_6, window_bounds = array<i64: 1, 10>}, {transform_indices = @transform_7, window_bounds = array<i64: 8, 10>}]} {
    %c0 = arith.constant 0 : index
    %c0_0 = arith.constant 0 : index
    %0 = vector.load %arg1[%c0, %c0_0] : memref<8x784xbf16, #tpu.memory_space<vmem>>, vector<8x784xbf16>
    %c0_1 = arith.constant 0 : index
    %c0_2 = arith.constant 0 : index
    %1 = vector.load %arg2[%c0_1, %c0_2] : memref<784x128xbf16, #tpu.memory_space<vmem>>, vector<784x128xbf16>
    %cst = arith.constant dense<0.000000e+00> : vector<8x128xf32>
    %2 = tpu.matmul %0, %1, %cst {dimension_numbers = #tpu.dot_dimension_numbers<[1], [0], [0], [1], [0, 0, 1, 1], [], []>} : vector<8x784xbf16>, vector<784x128xbf16>, vector<8x128xf32> -> vector<8x128xf32>
    %c0_3 = arith.constant 0 : index
    %c0_4 = arith.constant 0 : index
    %3 = vector.load %arg3[%c0_3, %c0_4] : memref<1x128xf32, #tpu.memory_space<vmem>>, vector<1x128xf32>
    %4 = vector.broadcast %3 : vector<1x128xf32> to vector<8x128xf32>
    %5 = arith.addf %2, %4 : vector<8x128xf32>
    %cst_5 = arith.constant 0.000000e+00 : f32
    %6 = vector.broadcast %cst_5 : f32 to vector<8x128xf32>
    %7 = arith.maximumf %5, %6 : vector<8x128xf32>
    %8 = arith.truncf %7 : vector<8x128xf32> to vector<8x128xbf16>
    %c0_6 = arith.constant 0 : index
    %c0_7 = arith.constant 0 : index
    %9 = vector.load %arg4[%c0_6, %c0_7] : memref<128x64xbf16, #tpu.memory_space<vmem>>, vector<128x64xbf16>
    %cst_8 = arith.constant dense<0.000000e+00> : vector<8x64xf32>
    %10 = tpu.matmul %8, %9, %cst_8 {dimension_numbers = #tpu.dot_dimension_numbers<[1], [0], [0], [1], [0, 0, 1, 1], [], []>} : vector<8x128xbf16>, vector<128x64xbf16>, vector<8x64xf32> -> vector<8x64xf32>
    %c0_9 = arith.constant 0 : index
    %c0_10 = arith.constant 0 : index
    %11 = vector.load %arg5[%c0_9, %c0_10] : memref<1x64xf32, #tpu.memory_space<vmem>>, vector<1x64xf32>
    %12 = vector.broadcast %11 : vector<1x64xf32> to vector<8x64xf32>
    %13 = arith.addf %10, %12 : vector<8x64xf32>
    %cst_11 = arith.constant 0.000000e+00 : f32
    %14 = vector.broadcast %cst_11 : f32 to vector<8x64xf32>
    %15 = arith.maximumf %13, %14 : vector<8x64xf32>
    %16 = arith.truncf %15 : vector<8x64xf32> to vector<8x64xbf16>
    %c0_12 = arith.constant 0 : index
    %c0_13 = arith.constant 0 : index
    %17 = vector.load %arg6[%c0_12, %c0_13] : memref<64x10xbf16, #tpu.memory_space<vmem>>, vector<64x10xbf16>
    %cst_14 = arith.constant dense<0.000000e+00> : vector<8x10xf32>
    %18 = tpu.matmul %16, %17, %cst_14 {dimension_numbers = #tpu.dot_dimension_numbers<[1], [0], [0], [1], [0, 0, 1, 1], [], []>} : vector<8x64xbf16>, vector<64x10xbf16>, vector<8x10xf32> -> vector<8x10xf32>
    %c0_15 = arith.constant 0 : index
    %c0_16 = arith.constant 0 : index
    %19 = vector.load %arg7[%c0_15, %c0_16] : memref<1x10xf32, #tpu.memory_space<vmem>>, vector<1x10xf32>
    %20 = vector.broadcast %19 : vector<1x10xf32> to vector<8x10xf32>
    %21 = arith.addf %18, %20 : vector<8x10xf32>
    %cst_17 = arith.constant dense<0xFF800000> : vector<8xf32>
    %22 = vector.multi_reduction <maximumf>, %21, %cst_17 [1] : vector<8x10xf32> to vector<8xf32>
    %23 = vector.shape_cast %22 : vector<8xf32> to vector<8x1xf32>
    %24 = vector.broadcast %23 : vector<8x1xf32> to vector<8x10xf32>
    %25 = arith.subf %21, %24 : vector<8x10xf32>
    %26 = math.exp %25 : vector<8x10xf32>
    %cst_18 = arith.constant dense<0.000000e+00> : vector<8xf32>
    %27 = vector.multi_reduction <add>, %26, %cst_18 [1] : vector<8x10xf32> to vector<8xf32>
    %28 = vector.shape_cast %27 : vector<8xf32> to vector<8x1xf32>
    %29 = math.log %28 : vector<8x1xf32>
    %30 = vector.broadcast %29 : vector<8x1xf32> to vector<8x10xf32>
    %31 = arith.subf %25, %30 : vector<8x10xf32>
    %c0_19 = arith.constant 0 : index
    %c0_20 = arith.constant 0 : index
    %32 = vector.load %arg8[%c0_19, %c0_20] : memref<8x10xf32, #tpu.memory_space<vmem>>, vector<8x10xf32>
    tpu.vector_store %arg8[%c0_19, %c0_20], %31 {strides = array<i32>} : memref<8x10xf32, #tpu.memory_space<vmem>>, vector<8x10xf32>,
    return
  }
  func.func @transform_0(%arg0: i32) -> (i32, i32) {
    %c0_i32 = arith.constant 0 : i32
    %c0_i32_0 = arith.constant 0 : i32
    return %arg0, %c0_i32 : i32, i32
  }
  func.func @transform_1(%arg0: i32) -> (i32, i32) {
    %c0_i32 = arith.constant 0 : i32
    %c0_i32_0 = arith.constant 0 : i32
    %c0_i32_1 = arith.constant 0 : i32
    return %c0_i32, %c0_i32_0 : i32, i32
  }
  func.func @transform_2(%arg0: i32) -> (i32, i32) {
    %c0_i32 = arith.constant 0 : i32
    %c0_i32_0 = arith.constant 0 : i32
    %c0_i32_1 = arith.constant 0 : i32
    return %c0_i32, %c0_i32_0 : i32, i32
  }
  func.func @transform_3(%arg0: i32) -> (i32, i32) {
    %c0_i32 = arith.constant 0 : i32
    %c0_i32_0 = arith.constant 0 : i32
    %c0_i32_1 = arith.constant 0 : i32
    return %c0_i32, %c0_i32_0 : i32, i32
  }
  func.func @transform_4(%arg0: i32) -> (i32, i32) {
    %c0_i32 = arith.constant 0 : i32
    %c0_i32_0 = arith.constant 0 : i32
    %c0_i32_1 = arith.constant 0 : i32
    return %c0_i32, %c0_i32_0 : i32, i32
  }
  func.func @transform_5(%arg0: i32) -> (i32, i32) {
    %c0_i32 = arith.constant 0 : i32
    %c0_i32_0 = arith.constant 0 : i32
    %c0_i32_1 = arith.constant 0 : i32
    return %c0_i32, %c0_i32_0 : i32, i32
  }
  func.func @transform_6(%arg0: i32) -> (i32, i32) {
    %c0_i32 = arith.constant 0 : i32
    %c0_i32_0 = arith.constant 0 : i32
    %c0_i32_1 = arith.constant 0 : i32
    return %c0_i32, %c0_i32_0 : i32, i32
  }
  func.func @transform_7(%arg0: i32) -> (i32, i32) {
    %c0_i32 = arith.constant 0 : i32
    %c0_i32_0 = arith.constant 0 : i32
    return %arg0, %c0_i32 : i32, i32
  }
}

</mosaic_0001>

<llo_original>
// kernel: tpu_custom_call.1
$region0: #{tpu_custom_call.1}
  #allocation0 [shape = 'u32[]', space=smem, size = 0x4, offset = 0x4, fixed_abs, tag = 'smem constant byte address 0x4 - core index']
  #allocation1 [shape = 'u32[144,128]{1,0:T(1,128)}', space=vmem, size = 0x12000, scoped, tag = 'internal scratch']
  %s0 = inlined_call_operand.vmem [shape: bf16[32,784], index: 0, kind: input, shape index: {}]
  %s1 = inlined_call_operand.hbm [shape: bf16[784,128], index: 1, kind: input, shape index: {}]
  %s2 = inlined_call_operand.vmem [shape: f32[1,128], index: 2, kind: input, shape index: {}]
  %s3 = inlined_call_operand.vmem [shape: bf16[128,64], index: 3, kind: input, shape index: {}]
  %s4 = inlined_call_operand.vmem [shape: f32[1,64], index: 4, kind: input, shape index: {}]
  %s5 = inlined_call_operand.vmem [shape: bf16[64,10], index: 5, kind: input, shape index: {}]
  %s6 = inlined_call_operand.vmem [shape: f32[1,10], index: 6, kind: input, shape index: {}]
  %s7 = inlined_call_operand.vmem [shape: f32[32,10], index: 7, kind: output, shape index: {}]
  %s8 = sld [smem:[#allocation0]]
  $region65: #{tpu_custom_call.1} parent=0
    _
  %s10 = ssub.s32 1, %s8
  %s11 = scalar_select 0, %s10, %s8
  $region1: #{tpu_custom_call.1} parent=0
    #allocation2 [shape = 'u8[200704]{0}', space=vmem, size = 0x31000, scoped, tag = 'input window, operand 1, single buffered']
    #allocation3 [shape = 's32[2]{0}', space=sflag, size = 0x8, scoped, tag = 'scoped memory for tpu_custom_call.1']
    %12 = vsyncpa [#allocation3], 0
    loop: start=0, step=1, limit=6
    $region2: #{tpu_custom_call.1} parent=1 // loop_pre_header
      _
    $region3: #{tpu_custom_call.1} parent=1 // loop_header
      %s14 = sphi 0, %s18
      %p15 = scmp.ge.s32.totalorder %s14, 6
      %s24 = sphi 0, %s26
      %s27 = sphi 0, %s24
      %s28 = sphi 0, %s27
      %s44 = sphi 0, %s28
      %s48 = sphi 0, %s48
      %s50 = sphi 0, %s48
      %s51 = sphi 0, %s50
      %s65 = sphi 0, %s51
      %s69 = sphi 0, %s69
      %s71 = sphi 0, %s69
      %s72 = sphi 0, %s71
      %s86 = sphi 0, %s72
      %s90 = sphi 0, %s90
      %s92 = sphi 0, %s90
      %s93 = sphi 0, %s92
      %s107 = sphi 0, %s93
      %s111 = sphi 0, %s111
      %s113 = sphi 0, %s111
      %s114 = sphi 0, %s113
      %s128 = sphi 0, %s114
      %s132 = sphi 0, %s132
      %s134 = sphi 0, %s132
      %s135 = sphi 0, %s134
      %s149 = sphi 0, %s135
      %s153 = sphi 0, %s153
      %s155 = sphi 0, %s153
      %s156 = sphi 0, %s155
      %s170 = sphi 0, %s156
      %s176 = sphi 0, %s178
      %s179 = sphi 0, %s176
      %s180 = sphi 0, %s179
      %s196 = sphi 0, %s180
    $region4: #{tpu_custom_call.1} parent=1 // loop_header_branch
      %17 = sbr.rel (%p15) target = $region8
    $region5: #{tpu_custom_call.1} parent=1 // loop_body
      %s19 = ssub.s32 %s14, 1
      %s20 = ssub.s32 %s14, 2
      %s21 = sadd.s32 %s14, 1
      %s22 = ssub.s32 %s14, %s21
      %p23 = scmp.eq.s32.totalorder %s22, 0
      %s25 = sadd.s32 %s24, 1
      %s26 = scalar_select %p23, %s24, %s25
      %p29 = pneg %p23
      %p30 = scmp.eq.s32.totalorder %s14, 3
      %p31 = por %p29, %p30
      %p32 = scmp.ne.s32.totalorder %s24, %s27
      %p33 = scmp.eq.s32.totalorder %s14, 0
      %p34 = por %p32, %p33
      %p35 = scmp.ne.s32.totalorder %s24, %s27
      %p36 = scmp.eq.s32.totalorder %s19, 3
      %p37 = por %p35, %p36
      %p38 = scmp.ne.s32.totalorder %s27, %s28
      %p39 = scmp.eq.s32.totalorder %s19, 0
      %p40 = por %p38, %p39
      %p41 = scmp.ne.s32.totalorder %s27, %s28
      %p42 = scmp.eq.s32.totalorder %s20, 3
      %p43 = por %p41, %p42
      %p45 = scmp.ne.s32.totalorder %s28, %s44
      %p46 = scmp.eq.s32.totalorder %s20, 0
      %p47 = por %p45, %p46
      %s49 = sadd.s32 %s48, 1
      %p52 = scmp.eq.s32.totalorder %s14, 3
      %p53 = scmp.ne.s32.totalorder %s48, %s50
      %p54 = scmp.eq.s32.totalorder %s14, 0
      %p55 = por %p53, %p54
      %p56 = scmp.ne.s32.totalorder %s48, %s50
      %p57 = scmp.eq.s32.totalorder %s19, 3
      %p58 = por %p56, %p57
      %p59 = scmp.ne.s32.totalorder %s50, %s51
      %p60 = scmp.eq.s32.totalorder %s19, 0
      %p61 = por %p59, %p60
      %p62 = scmp.ne.s32.totalorder %s50, %s51
      %p63 = scmp.eq.s32.totalorder %s20, 3
      %p64 = por %p62, %p63
      %p66 = scmp.ne.s32.totalorder %s51, %s65
      %p67 = scmp.eq.s32.totalorder %s20, 0
      %p68 = por %p66, %p67
      %s70 = sadd.s32 %s69, 1
      %p73 = scmp.eq.s32.totalorder %s14, 3
      %p74 = scmp.ne.s32.totalorder %s69, %s71
      %p75 = scmp.eq.s32.totalorder %s14, 0
      %p76 = por %p74, %p75
      %p77 = scmp.ne.s32.totalorder %s69, %s71
      %p78 = scmp.eq.s32.totalorder %s19, 3
      %p79 = por %p77, %p78
      %p80 = scmp.ne.s32.totalorder %s71, %s72
      %p81 = scmp.eq.s32.totalorder %s19, 0
      %p82 = por %p80, %p81
      %p83 = scmp.ne.s32.totalorder %s71, %s72
      %p84 = scmp.eq.s32.totalorder %s20, 3
      %p85 = por %p83, %p84
      %p87 = scmp.ne.s32.totalorder %s72, %s86
      %p88 = scmp.eq.s32.totalorder %s20, 0
      %p89 = por %p87, %p88
      %s91 = sadd.s32 %s90, 1
      %p94 = scmp.eq.s32.totalorder %s14, 3
      %p95 = scmp.ne.s32.totalorder %s90, %s92
      %p96 = scmp.eq.s32.totalorder %s14, 0
      %p97 = por %p95, %p96
      %p98 = scmp.ne.s32.totalorder %s90, %s92
      %p99 = scmp.eq.s32.totalorder %s19, 3
      %p100 = por %p98, %p99
      %p101 = scmp.ne.s32.totalorder %s92, %s93
      %p102 = scmp.eq.s32.totalorder %s19, 0
      %p103 = por %p101, %p102
      %p104 = scmp.ne.s32.totalorder %s92, %s93
      %p105 = scmp.eq.s32.totalorder %s20, 3
      %p106 = por %p104, %p105
      %p108 = scmp.ne.s32.totalorder %s93, %s107
      %p109 = scmp.eq.s32.totalorder %s20, 0
      %p110 = por %p108, %p109
      %s112 = sadd.s32 %s111, 1
      %p115 = scmp.eq.s32.totalorder %s14, 3
      %p116 = scmp.ne.s32.totalorder %s111, %s113
      %p117 = scmp.eq.s32.totalorder %s14, 0
      %p118 = por %p116, %p117
      %p119 = scmp.ne.s32.totalorder %s111, %s113
      %p120 = scmp.eq.s32.totalorder %s19, 3
      %p121 = por %p119, %p120
      %p122 = scmp.ne.s32.totalorder %s113, %s114
      %p123 = scmp.eq.s32.totalorder %s19, 0
      %p124 = por %p122, %p123
      %p125 = scmp.ne.s32.totalorder %s113, %s114
      %p126 = scmp.eq.s32.totalorder %s20, 3
      %p127 = por %p125, %p126
      %p129 = scmp.ne.s32.totalorder %s114, %s128
      %p130 = scmp.eq.s32.totalorder %s20, 0
      %p131 = por %p129, %p130
      %s133 = sadd.s32 %s132, 1
      %p136 = scmp.eq.s32.totalorder %s14, 3
      %p137 = scmp.ne.s32.totalorder %s132, %s134
      %p138 = scmp.eq.s32.totalorder %s14, 0
      %p139 = por %p137, %p138
      %p140 = scmp.ne.s32.totalorder %s132, %s134
      %p141 = scmp.eq.s32.totalorder %s19, 3
      %p142 = por %p140, %p141
      %p143 = scmp.ne.s32.totalorder %s134, %s135
      %p144 = scmp.eq.s32.totalorder %s19, 0
      %p145 = por %p143, %p144
      %p146 = scmp.ne.s32.totalorder %s134, %s135
      %p147 = scmp.eq.s32.totalorder %s20, 3
      %p148 = por %p146, %p147
      %p150 = scmp.ne.s32.totalorder %s135, %s149
      %p151 = scmp.eq.s32.totalorder %s20, 0
      %p152 = por %p150, %p151
      %s154 = sadd.s32 %s153, 1
      %p157 = scmp.eq.s32.totalorder %s14, 3
      %p158 = scmp.ne.s32.totalorder %s153, %s155
      %p159 = scmp.eq.s32.totalorder %s14, 0
      %p160 = por %p158, %p159
      %p161 = scmp.ne.s32.totalorder %s153, %s155
      %p162 = scmp.eq.s32.totalorder %s19, 3
      %p163 = por %p161, %p162
      %p164 = scmp.ne.s32.totalorder %s155, %s156
      %p165 = scmp.eq.s32.totalorder %s19, 0
      %p166 = por %p164, %p165
      %p167 = scmp.ne.s32.totalorder %s155, %s156
      %p168 = scmp.eq.s32.totalorder %s20, 3
      %p169 = por %p167, %p168
      %p171 = scmp.ne.s32.totalorder %s156, %s170
      %p172 = scmp.eq.s32.totalorder %s20, 0
      %p173 = por %p171, %p172
      %s174 = ssub.s32 %s14, %s21
      %p175 = scmp.eq.s32.totalorder %s174, 0
      %s177 = sadd.s32 %s176, 1
      %s178 = scalar_select %p175, %s176, %s177
      %p181 = pneg %p175
      %p182 = scmp.eq.s32.totalorder %s14, 3
      %p183 = por %p181, %p182
      %p184 = scmp.ne.s32.totalorder %s176, %s179
      %p185 = scmp.eq.s32.totalorder %s14, 0
      %p186 = por %p184, %p185
      %p187 = scmp.ne.s32.totalorder %s176, %s179
      %p188 = scmp.eq.s32.totalorder %s19, 3
      %p189 = por %p187, %p188
      %p190 = scmp.ne.s32.totalorder %s179, %s180
      %p191 = scmp.eq.s32.totalorder %s19, 0
      %p192 = por %p190, %p191
      %p193 = scmp.ne.s32.totalorder %s179, %s180
      %p194 = scmp.eq.s32.totalorder %s20, 3
      %p195 = por %p193, %p194
      %p197 = scmp.ne.s32.totalorder %s180, %s196
      %p198 = scmp.eq.s32.totalorder %s20, 0
      %p199 = por %p197, %p198
      %p200 = scmp.le.s32.totalorder 1, %s14
      %p201 = scmp.lt.s32.totalorder %s14, 5
      %p202 = pnand %p200, %p201
      %p203 = pneg %p202
      // Predicated region
      $region9: #{tpu_custom_call.1} parent=5 // pred_check
        _
      $region10: #{tpu_custom_call.1} parent=5 // pred_check_branch
        %205 = sbr.rel (%p202) target = $region12
      $region11: #{tpu_custom_call.1} parent=5 // pred_region
        %s206 = ssub.s32 %s14, 1
        // Predicated region
        $region13: #{tpu_custom_call.1} parent=11 // pred_check
          %p207 = pneg %p61
        $region14: #{tpu_custom_call.1} parent=11 // pred_check_branch
          %209 = sbr.rel (%p207) target = $region16
        $region15: #{tpu_custom_call.1} parent=11 // pred_region
          %s211 = ssub.s32 6272, 6272
          %212 = vsyncadd [#allocation3], %s211
          %s213 = sshll.u32 [#allocation2], 4
          %s214 = int_to_ptr.vmem [resolvable:$true] %s213
          %219 = dma.hbm_to_vmem [thread:$0]  %s1, 6272, %s214, [#allocation3], 64, 64, 4
        $region16: #{tpu_custom_call.1} parent=11 // pred_fallthru
          _
        // Predicated region
        $region17: #{tpu_custom_call.1} parent=11 // pred_check
          %p220 = pneg %p82
        $region18: #{tpu_custom_call.1} parent=11 // pred_check_branch
          %222 = sbr.rel (%p220) target = $region20
        $region19: #{tpu_custom_call.1} parent=11 // pred_region
          _
        $region20: #{tpu_custom_call.1} parent=11 // pred_fallthru
          _
        // Predicated region
        $region21: #{tpu_custom_call.1} parent=11 // pred_check
          %p223 = pneg %p103
        $region22: #{tpu_custom_call.1} parent=11 // pred_check_branch
          %225 = sbr.rel (%p223) target = $region24
        $region23: #{tpu_custom_call.1} parent=11 // pred_region
          _
        $region24: #{tpu_custom_call.1} parent=11 // pred_fallthru
          _
        // Predicated region
        $region25: #{tpu_custom_call.1} parent=11 // pred_check
          %p226 = pneg %p124
        $region26: #{tpu_custom_call.1} parent=11 // pred_check_branch
          %228 = sbr.rel (%p226) target = $region28
        $region27: #{tpu_custom_call.1} parent=11 // pred_region
          _
        $region28: #{tpu_custom_call.1} parent=11 // pred_fallthru
          _
        // Predicated region
        $region29: #{tpu_custom_call.1} parent=11 // pred_check
          %p229 = pneg %p145
        $region30: #{tpu_custom_call.1} parent=11 // pred_check_branch
          %231 = sbr.rel (%p229) target = $region32
        $region31: #{tpu_custom_call.1} parent=11 // pred_region
          _
        $region32: #{tpu_custom_call.1} parent=11 // pred_fallthru
          _
        // Predicated region
        $region33: #{tpu_custom_call.1} parent=11 // pred_check
          %p232 = pneg %p166
        $region34: #{tpu_custom_call.1} parent=11 // pred_check_branch
          %234 = sbr.rel (%p232) target = $region36
        $region35: #{tpu_custom_call.1} parent=11 // pred_region
          _
        $region36: #{tpu_custom_call.1} parent=11 // pred_fallthru
          _
      $region12: #{tpu_custom_call.1} parent=5 // pred_fallthru
        _
      %p235 = scmp.lt.s32.totalorder %s14, 4
      // Predicated region
      $region37: #{tpu_custom_call.1} parent=5 // pred_check
        %p236 = pneg %p235
      $region38: #{tpu_custom_call.1} parent=5 // pred_check_branch
        %238 = sbr.rel (%p236) target = $region40
      $region39: #{tpu_custom_call.1} parent=5 // pred_region
        // Predicated region
        $region41: #{tpu_custom_call.1} parent=39 // pred_check
          %p239 = pneg %p34
        $region42: #{tpu_custom_call.1} parent=39 // pred_check_branch
          %241 = sbr.rel (%p239) target = $region44
        $region43: #{tpu_custom_call.1} parent=39 // pred_region
          %p242 = scmp.lt.s32.totalorder %s14, 3
          %s243 = scalar_select %p242, %s14, 3
          %s244 = smul.addr %s243, 7
          %s245 = smul.addr %s244, 4
          %s246 = scalar_lea.vmem %s0, %s245
        $region44: #{tpu_custom_call.1} parent=39 // pred_fallthru
          _
      $region40: #{tpu_custom_call.1} parent=5 // pred_fallthru
        _
      %p247 = scmp.le.s32.totalorder 1, %s14
      %p248 = scmp.lt.s32.totalorder %s14, 5
      %p249 = pnand %p247, %p248
      %p250 = pneg %p249
      // Predicated region
      $region45: #{tpu_custom_call.1} parent=5 // pred_check
        _
      $region46: #{tpu_custom_call.1} parent=5 // pred_check_branch
        %252 = sbr.rel (%p249) target = $region48
      $region47: #{tpu_custom_call.1} parent=5 // pred_region
        %s253 = ssub.s32 %s14, 1
        // Predicated region
        $region49: #{tpu_custom_call.1} parent=47 // pred_check
          %p254 = pneg %p61
        $region50: #{tpu_custom_call.1} parent=47 // pred_check_branch
          %256 = sbr.rel (%p254) target = $region52
        $region51: #{tpu_custom_call.1} parent=47 // pred_region
          %257 = dma.done [#allocation3], 6272
        $region52: #{tpu_custom_call.1} parent=47 // pred_fallthru
          _
        %p258 = scmp.lt.s32.totalorder %s19, 3
        %s259 = scalar_select %p258, %s19, 3
        %s260 = smul.addr %s259, 7
        %s261 = smul.addr %s260, 4
        %s262 = scalar_lea.vmem %s0, %s261
        %p263 = pneg %p40
        %p264 = pneg %p37
        %p265 = pneg %p61
        %p266 = pneg %p58
        %p267 = pneg %p82
        %p268 = pneg %p79
        %p269 = pneg %p103
        %p270 = pneg %p100
        %p271 = pneg %p124
        %p272 = pneg %p121
        %p273 = pneg %p145
        %p274 = pneg %p142
        %p275 = pneg %p166
        %p276 = pneg %p163
        %p277 = pneg %p192
        %p278 = pneg %p189
        %p279 = scmp.lt.s32.totalorder %s19, 3
        %s280 = scalar_select %p279, %s19, 3
        %s281 = smul.addr %s280, 8
        %s282 = scalar_lea.vmem %s7, %s281
        %p283 = scmp.lt.s32.totalorder %s19, 3
        %s284 = scalar_select %p283, %s19, 3
        %s285 = smul.addr %s284, 7
        %s286 = smul.addr %s285, 4
        %s287 = scalar_lea.vmem %s0, %s286
        %p288 = scmp.lt.s32.totalorder %s19, 3
        %s289 = scalar_select %p288, %s19, 3
        %s290 = smul.addr %s289, 8
        %s291 = scalar_lea.vmem %s7, %s290
        %v293 = vld [vmem:[%s287] sm:$0xff]
        %v294 = vld [vmem:[%s287 + $0x8] sm:$0xff]
        %v295 = vld [vmem:[%s287 + $0x10] sm:$0xff]
        %v296 = vld [vmem:[%s287 + $0x18] sm:$0xf]
        %v297 = vld [vmem:[#allocation2] sm:$0xf]
        %v298 = vld [vmem:[#allocation2 + $0x4] sm:$0xf]
        %v299 = vld [vmem:[#allocation2 + $0x8] sm:$0xf]
        %v300 = vld [vmem:[#allocation2 + $0xc] sm:$0xf]
        %v301 = vld [vmem:[#allocation2 + $0x10] sm:$0xf]
        %v302 = vld [vmem:[#allocation2 + $0x14] sm:$0xf]
        %v303 = vld [vmem:[#allocation2 + $0x18] sm:$0xf]
        %v304 = vld [vmem:[#allocation2 + $0x1c] sm:$0xf]
        %v305 = vld [vmem:[#allocation2 + $0x20] sm:$0xf]
        %v306 = vld [vmem:[#allocation2 + $0x24] sm:$0xf]
        %v307 = vld [vmem:[#allocation2 + $0x28] sm:$0xf]
        %v308 = vld [vmem:[#allocation2 + $0x2c] sm:$0xf]
        %v309 = vld [vmem:[#allocation2 + $0x30] sm:$0xf]
        %v310 = vld [vmem:[#allocation2 + $0x34] sm:$0xf]
        %v311 = vld [vmem:[#allocation2 + $0x38] sm:$0xf]
        %v312 = vld [vmem:[#allocation2 + $0x3c] sm:$0xf]
        %v313 = vld [vmem:[#allocation2 + $0x40] sm:$0xf]
        %v314 = vld [vmem:[#allocation2 + $0x44] sm:$0xf]
        %v315 = vld [vmem:[#allocation2 + $0x48] sm:$0xf]
        %v316 = vld [vmem:[#allocation2 + $0x4c] sm:$0xf]
        %v317 = vld [vmem:[#allocation2 + $0x50] sm:$0xf]
        %v318 = vld [vmem:[#allocation2 + $0x54] sm:$0xf]
        %v319 = vld [vmem:[#allocation2 + $0x58] sm:$0xf]
        %v320 = vld [vmem:[#allocation2 + $0x5c] sm:$0xf]
        %v321 = vld [vmem:[#allocation2 + $0x60] sm:$0xf]
        %v322 = vld [vmem:[#allocation2 + $0x64] sm:$0xf]
        %v323 = vld [vmem:[#allocation2 + $0x68] sm:$0xf]
        %v324 = vld [vmem:[#allocation2 + $0x6c] sm:$0xf]
        %v325 = vld [vmem:[#allocation2 + $0x70] sm:$0xf]
        %v326 = vld [vmem:[#allocation2 + $0x74] sm:$0xf]
        %v327 = vld [vmem:[#allocation2 + $0x78] sm:$0xf]
        %v328 = vld [vmem:[#allocation2 + $0x7c] sm:$0xf]
        %v329 = vld [vmem:[#allocation2 + $0x80] sm:$0xf]
        %v330 = vld [vmem:[#allocation2 + $0x84] sm:$0xf]
        %v331 = vld [vmem:[#allocation2 + $0x88] sm:$0xf]
        %v332 = vld [vmem:[#allocation2 + $0x8c] sm:$0xf]
        %v333 = vld [vmem:[#allocation2 + $0x90] sm:$0xf]
        %v334 = vld [vmem:[#allocation2 + $0x94] sm:$0xf]
        %v335 = vld [vmem:[#allocation2 + $0x98] sm:$0xf]
        %v336 = vld [vmem:[#allocation2 + $0x9c] sm:$0xf]
        %v337 = vld [vmem:[#allocation2 + $0xa0] sm:$0xf]
        %v338 = vld [vmem:[#allocation2 + $0xa4] sm:$0xf]
        %v339 = vld [vmem:[#allocation2 + $0xa8] sm:$0xf]
        %v340 = vld [vmem:[#allocation2 + $0xac] sm:$0xf]
        %v341 = vld [vmem:[#allocation2 + $0xb0] sm:$0xf]
        %v342 = vld [vmem:[#allocation2 + $0xb4] sm:$0xf]
        %v343 = vld [vmem:[#allocation2 + $0xb8] sm:$0xf]
        %v344 = vld [vmem:[#allocation2 + $0xbc] sm:$0xf]
        %v345 = vld [vmem:[#allocation2 + $0xc0] sm:$0xf]
        %v346 = vld [vmem:[#allocation2 + $0xc4] sm:$0xf]
        %v347 = vld [vmem:[#allocation2 + $0xc8] sm:$0xf]
        %v348 = vld [vmem:[#allocation2 + $0xcc] sm:$0xf]
        %v349 = vld [vmem:[#allocation2 + $0xd0] sm:$0xf]
        %v350 = vld [vmem:[#allocation2 + $0xd4] sm:$0xf]
        %v351 = vld [vmem:[#allocation2 + $0xd8] sm:$0xf]
        %v352 = vld [vmem:[#allocation2 + $0xdc] sm:$0xf]
        %v353 = vld [vmem:[#allocation2 + $0xe0] sm:$0xf]
        %v354 = vld [vmem:[#allocation2 + $0xe4] sm:$0xf]
        %v355 = vld [vmem:[#allocation2 + $0xe8] sm:$0xf]
        %v356 = vld [vmem:[#allocation2 + $0xec] sm:$0xf]
        %v357 = vld [vmem:[#allocation2 + $0xf0] sm:$0xf]
        %v358 = vld [vmem:[#allocation2 + $0xf4] sm:$0xf]
        %v359 = vld [vmem:[#allocation2 + $0xf8] sm:$0xf]
        %v360 = vld [vmem:[#allocation2 + $0xfc] sm:$0xf]
        %v361 = vld [vmem:[#allocation2 + $0x100] sm:$0xf]
        %v362 = vld [vmem:[#allocation2 + $0x104] sm:$0xf]
        %v363 = vld [vmem:[#allocation2 + $0x108] sm:$0xf]
        %v364 = vld [vmem:[#allocation2 + $0x10c] sm:$0xf]
        %v365 = vld [vmem:[#allocation2 + $0x110] sm:$0xf]
        %v366 = vld [vmem:[#allocation2 + $0x114] sm:$0xf]
        %v367 = vld [vmem:[#allocation2 + $0x118] sm:$0xf]
        %v368 = vld [vmem:[#allocation2 + $0x11c] sm:$0xf]
        %v369 = vld [vmem:[#allocation2 + $0x120] sm:$0xf]
        %v370 = vld [vmem:[#allocation2 + $0x124] sm:$0xf]
        %v371 = vld [vmem:[#allocation2 + $0x128] sm:$0xf]
        %v372 = vld [vmem:[#allocation2 + $0x12c] sm:$0xf]
        %v373 = vld [vmem:[#allocation2 + $0x130] sm:$0xf]
        %v374 = vld [vmem:[#allocation2 + $0x134] sm:$0xf]
        %v375 = vld [vmem:[#allocation2 + $0x138] sm:$0xf]
        %v376 = vld [vmem:[#allocation2 + $0x13c] sm:$0xf]
        %v377 = vld [vmem:[#allocation2 + $0x140] sm:$0xf]
        %v378 = vld [vmem:[#allocation2 + $0x144] sm:$0xf]
        %v379 = vld [vmem:[#allocation2 + $0x148] sm:$0xf]
        %v380 = vld [vmem:[#allocation2 + $0x14c] sm:$0xf]
        %v381 = vld [vmem:[#allocation2 + $0x150] sm:$0xf]
        %v382 = vld [vmem:[#allocation2 + $0x154] sm:$0xf]
        %v383 = vld [vmem:[#allocation2 + $0x158] sm:$0xf]
        %v384 = vld [vmem:[#allocation2 + $0x15c] sm:$0xf]
        %v385 = vld [vmem:[#allocation2 + $0x160] sm:$0xf]
        %v386 = vld [vmem:[#allocation2 + $0x164] sm:$0xf]
        %v387 = vld [vmem:[#allocation2 + $0x168] sm:$0xf]
        %v388 = vld [vmem:[#allocation2 + $0x16c] sm:$0xf]
        %v389 = vld [vmem:[#allocation2 + $0x170] sm:$0xf]
        %v390 = vld [vmem:[#allocation2 + $0x174] sm:$0xf]
        %v391 = vld [vmem:[#allocation2 + $0x178] sm:$0xf]
        %v392 = vld [vmem:[#allocation2 + $0x17c] sm:$0xf]
        %v393 = vld [vmem:[#allocation2 + $0x180] sm:$0xf]
        %v394 = vld [vmem:[#allocation2 + $0x184] sm:$0xf]
        %v395 = vld [vmem:[%s2] sm:$0x1]
        %v397 = vlaneseq
        %v398 = vshrl.u32 %v397, 7
        %v399 = vsub.s32 0, %v398
        %v400 = vrot.slane %v395, %v399
        %v406 = vunpack.c.l.b16 %v293
        %v407 = vunpack.c.h.b16 %v293
        %v408 = vunpack.c.l.b16 %v294
        %v409 = vunpack.c.h.b16 %v294
        %v410 = vunpack.c.l.b16 %v295
        %v411 = vunpack.c.h.b16 %v295
        %v412 = vunpack.c.l.b16 %v296
        %v413 = vpack.c.b16 %v406, %v406
        %v414 = vpack.c.b16 %v407, %v407
        %v415 = vpack.c.b16 %v408, %v408
        %v416 = vpack.c.b16 %v409, %v409
        %v417 = vpack.c.b16 %v410, %v410
        %v418 = vpack.c.b16 %v411, %v411
        %v419 = vpack.c.b16 %v412, %v412
        %v524 = vunpack.c.l.b16 %v297
        %v525 = vunpack.c.l.b16 %v298
        %v526 = vunpack.c.l.b16 %v299
        %v527 = vunpack.c.l.b16 %v300
        %v528 = vunpack.c.l.b16 %v301
        %v529 = vunpack.c.l.b16 %v302
        %v530 = vunpack.c.l.b16 %v303
        %v531 = vunpack.c.l.b16 %v304
        %v532 = vunpack.c.l.b16 %v305
        %v533 = vunpack.c.l.b16 %v306
        %v534 = vunpack.c.l.b16 %v307
        %v535 = vunpack.c.l.b16 %v308
        %v536 = vunpack.c.l.b16 %v309
        %v537 = vunpack.c.l.b16 %v310
        %v538 = vunpack.c.l.b16 %v311
        %v539 = vunpack.c.l.b16 %v312
        %v540 = vunpack.c.l.b16 %v313
        %v541 = vunpack.c.l.b16 %v314
        %v542 = vunpack.c.l.b16 %v315
        %v543 = vunpack.c.l.b16 %v316
        %v544 = vunpack.c.l.b16 %v317
        %v545 = vunpack.c.l.b16 %v318
        %v546 = vunpack.c.l.b16 %v319
        %v547 = vunpack.c.l.b16 %v320
        %v548 = vunpack.c.l.b16 %v321
        %v549 = vunpack.c.l.b16 %v322
        %v550 = vunpack.c.l.b16 %v323
        %v551 = vunpack.c.l.b16 %v324
        %v552 = vunpack.c.l.b16 %v325
        %v553 = vunpack.c.l.b16 %v326
        %v554 = vunpack.c.l.b16 %v327
        %v555 = vunpack.c.l.b16 %v328
        %v556 = vunpack.c.l.b16 %v329
        %v557 = vunpack.c.l.b16 %v330
        %v558 = vunpack.c.l.b16 %v331
        %v559 = vunpack.c.l.b16 %v332
        %v560 = vunpack.c.l.b16 %v333
        %v561 = vunpack.c.l.b16 %v334
        %v562 = vunpack.c.l.b16 %v335
        %v563 = vunpack.c.l.b16 %v336
        %v564 = vunpack.c.l.b16 %v337
        %v565 = vunpack.c.l.b16 %v338
        %v566 = vunpack.c.l.b16 %v339
        %v567 = vunpack.c.l.b16 %v340
        %v568 = vunpack.c.l.b16 %v341
        %v569 = vunpack.c.l.b16 %v342
        %v570 = vunpack.c.l.b16 %v343
        %v571 = vunpack.c.l.b16 %v344
        %v572 = vunpack.c.l.b16 %v345
        %v573 = vunpack.c.l.b16 %v346
        %v574 = vunpack.c.l.b16 %v347
        %v575 = vunpack.c.l.b16 %v348
        %v576 = vunpack.c.l.b16 %v349
        %v577 = vunpack.c.l.b16 %v350
        %v578 = vunpack.c.l.b16 %v351
        %v579 = vunpack.c.l.b16 %v352
        %v580 = vunpack.c.l.b16 %v353
        %v581 = vunpack.c.l.b16 %v354
        %v582 = vunpack.c.l.b16 %v355
        %v583 = vunpack.c.l.b16 %v356
        %v584 = vunpack.c.l.b16 %v357
        %v585 = vunpack.c.l.b16 %v358
        %v586 = vunpack.c.l.b16 %v359
        %v587 = vunpack.c.l.b16 %v360
        %v588 = vunpack.c.l.b16 %v361
        %v589 = vunpack.c.l.b16 %v362
        %v590 = vunpack.c.l.b16 %v363
        %v591 = vunpack.c.l.b16 %v364
        %v592 = vunpack.c.l.b16 %v365
        %v593 = vunpack.c.l.b16 %v366
        %v594 = vunpack.c.l.b16 %v367
        %v595 = vunpack.c.l.b16 %v368
        %v596 = vunpack.c.l.b16 %v369
        %v597 = vunpack.c.l.b16 %v370
        %v598 = vunpack.c.l.b16 %v371
        %v599 = vunpack.c.l.b16 %v372
        %v600 = vunpack.c.l.b16 %v373
        %v601 = vunpack.c.l.b16 %v374
        %v602 = vunpack.c.l.b16 %v375
        %v603 = vunpack.c.l.b16 %v376
        %v604 = vunpack.c.l.b16 %v377
        %v605 = vunpack.c.l.b16 %v378
        %v606 = vunpack.c.l.b16 %v379
        %v607 = vunpack.c.l.b16 %v380
        %v608 = vunpack.c.l.b16 %v381
        %v609 = vunpack.c.l.b16 %v382
        %v610 = vunpack.c.l.b16 %v383
        %v611 = vunpack.c.l.b16 %v384
        %v612 = vunpack.c.l.b16 %v385
        %v613 = vunpack.c.l.b16 %v386
        %v614 = vunpack.c.l.b16 %v387
        %v615 = vunpack.c.l.b16 %v388
        %v616 = vunpack.c.l.b16 %v389
        %v617 = vunpack.c.l.b16 %v390
        %v618 = vunpack.c.l.b16 %v391
        %v619 = vunpack.c.l.b16 %v392
        %v620 = vunpack.c.l.b16 %v393
        %v621 = vunpack.c.l.b16 %v394
        %v622 = vpack.c.b16 %v525, %v524
        %v623 = vpack.c.b16 %v527, %v526
        %v624 = vpack.c.b16 %v529, %v528
        %v625 = vpack.c.b16 %v531, %v530
        %v626 = vpack.c.b16 %v533, %v532
        %v627 = vpack.c.b16 %v535, %v534
        %v628 = vpack.c.b16 %v537, %v536
        %v629 = vpack.c.b16 %v539, %v538
        %v630 = vpack.c.b16 %v541, %v540
        %v631 = vpack.c.b16 %v543, %v542
        %v632 = vpack.c.b16 %v545, %v544
        %v633 = vpack.c.b16 %v547, %v546
        %v634 = vpack.c.b16 %v549, %v548
        %v635 = vpack.c.b16 %v551, %v550
        %v636 = vpack.c.b16 %v553, %v552
        %v637 = vpack.c.b16 %v555, %v554
        %v638 = vpack.c.b16 %v557, %v556
        %v639 = vpack.c.b16 %v559, %v558
        %v640 = vpack.c.b16 %v561, %v560
        %v641 = vpack.c.b16 %v563, %v562
        %v642 = vpack.c.b16 %v565, %v564
        %v643 = vpack.c.b16 %v567, %v566
        %v644 = vpack.c.b16 %v569, %v568
        %v645 = vpack.c.b16 %v571, %v570
        %v646 = vpack.c.b16 %v573, %v572
        %v647 = vpack.c.b16 %v575, %v574
        %v648 = vpack.c.b16 %v577, %v576
        %v649 = vpack.c.b16 %v579, %v578
        %v650 = vpack.c.b16 %v581, %v580
        %v651 = vpack.c.b16 %v583, %v582
        %v652 = vpack.c.b16 %v585, %v584
        %v653 = vpack.c.b16 %v587, %v586
        %v654 = vpack.c.b16 %v589, %v588
        %v655 = vpack.c.b16 %v591, %v590
        %v656 = vpack.c.b16 %v593, %v592
        %v657 = vpack.c.b16 %v595, %v594
        %v658 = vpack.c.b16 %v597, %v596
        %v659 = vpack.c.b16 %v599, %v598
        %v660 = vpack.c.b16 %v601, %v600
        %v661 = vpack.c.b16 %v603, %v602
        %v662 = vpack.c.b16 %v605, %v604
        %v663 = vpack.c.b16 %v607, %v606
        %v664 = vpack.c.b16 %v609, %v608
        %v665 = vpack.c.b16 %v611, %v610
        %v666 = vpack.c.b16 %v613, %v612
        %v667 = vpack.c.b16 %v615, %v614
        %v668 = vpack.c.b16 %v617, %v616
        %v669 = vpack.c.b16 %v619, %v618
        %v670 = vpack.c.b16 %v621, %v620
        %vm720 = vcmask 130048
        %v722 = vsel %vm720, %v419, 0
        %724 = vmatprep.subr.bf16.mxu0 0
        %725 = vmatpush1.bf16.msra.mxu0 %v622
        %726 = vmatprep.subr.bf16.mxu0 0
        %727 = vmatpush1.bf16.msra.mxu0 %v623
        %728 = vmatprep.subr.bf16.mxu0 0
        %729 = vmatpush1.bf16.msra.mxu0 %v624
        %730 = vmatprep.subr.bf16.mxu0 0
        %731 = vmatpush1.bf16.msra.mxu0 %v625
        %732 = vmatprep.subr.bf16.mxu0 0
        %733 = vmatpush1.bf16.msra.mxu0 %v626
        %734 = vmatprep.subr.bf16.mxu0 0
        %735 = vmatpush1.bf16.msra.mxu0 %v627
        %736 = vmatprep.subr.bf16.mxu0 0
        %737 = vmatpush1.bf16.msra.mxu0 %v628
        %738 = vmatprep.subr.bf16.mxu0 0
        %739 = vmatpush1.bf16.msra.mxu0 %v629
        %740 = vmatprep.subr.bf16.mxu0 0
        %741 = vmatpush1.bf16.msra.mxu0 %v630
        %742 = vmatprep.subr.bf16.mxu0 0
        %743 = vmatpush1.bf16.msra.mxu0 %v631
        %744 = vmatprep.subr.bf16.mxu0 0
        %745 = vmatpush1.bf16.msra.mxu0 %v632
        %746 = vmatprep.subr.bf16.mxu0 0
        %747 = vmatpush1.bf16.msra.mxu0 %v633
        %748 = vmatprep.subr.bf16.mxu0 0
        %749 = vmatpush1.bf16.msra.mxu0 %v634
        %750 = vmatprep.subr.bf16.mxu0 0
        %751 = vmatpush1.bf16.msra.mxu0 %v635
        %752 = vmatprep.subr.bf16.mxu0 0
        %753 = vmatpush1.bf16.msra.mxu0 %v636
        %754 = vmatprep.subr.bf16.mxu0 0
        %755 = vmatpush1.bf16.msra.mxu0 %v637
        %756 = vmatprep.mubr.bf16.mxu0 %v414
        %757 = vmatmul.mubr.bf16.gmra.mrb[0].mxu0 %v413
        %v758 = vpop.f32.mrb[0].mxu0
        %v759 = vadd.f32 %v400, %v758
        %v760 = vpop.f32.mrb[0].mxu0
        %v761 = vpop.f32.mrb[0].mxu0
        %v762 = vpop.f32.mrb[0].mxu0
        %763 = vdwg.mxu0
        %764 = vmatprep.subr.bf16.mxu0 0
        %765 = vmatpush1.bf16.msra.mxu0 %v638
        %766 = vmatprep.subr.bf16.mxu0 0
        %767 = vmatpush1.bf16.msra.mxu0 %v639
        %768 = vmatprep.subr.bf16.mxu0 0
        %769 = vmatpush1.bf16.msra.mxu0 %v640
        %770 = vmatprep.subr.bf16.mxu0 0
        %771 = vmatpush1.bf16.msra.mxu0 %v641
        %772 = vmatprep.subr.bf16.mxu0 0
        %773 = vmatpush1.bf16.msra.mxu0 %v642
        %774 = vmatprep.subr.bf16.mxu0 0
        %775 = vmatpush1.bf16.msra.mxu0 %v643
        %776 = vmatprep.subr.bf16.mxu0 0
        %777 = vmatpush1.bf16.msra.mxu0 %v644
        %778 = vmatprep.subr.bf16.mxu0 0
        %779 = vmatpush1.bf16.msra.mxu0 %v645
        %780 = vmatprep.subr.bf16.mxu0 0
        %781 = vmatpush1.bf16.msra.mxu0 %v646
        %782 = vmatprep.subr.bf16.mxu0 0
        %783 = vmatpush1.bf16.msra.mxu0 %v647
        %784 = vmatprep.subr.bf16.mxu0 0
        %785 = vmatpush1.bf16.msra.mxu0 %v648
        %786 = vmatprep.subr.bf16.mxu0 0
        %787 = vmatpush1.bf16.msra.mxu0 %v649
        %788 = vmatprep.subr.bf16.mxu0 0
        %789 = vmatpush1.bf16.msra.mxu0 %v650
        %790 = vmatprep.subr.bf16.mxu0 0
        %791 = vmatpush1.bf16.msra.mxu0 %v651
        %792 = vmatprep.subr.bf16.mxu0 0
        %793 = vmatpush1.bf16.msra.mxu0 %v652
        %794 = vmatprep.subr.bf16.mxu0 0
        %795 = vmatpush1.bf16.msra.mxu0 %v653
        %796 = vmatprep.mubr.bf16.mxu0 %v416
        %797 = vmatmul.mubr.bf16.gmra.mrb[0].mxu0 %v415
        %v798 = vpop.f32.mrb[0].mxu0
        %v799 = vadd.f32 %v759, %v798
        %v800 = vpop.f32.mrb[0].mxu0
        %v801 = vpop.f32.mrb[0].mxu0
        %v802 = vpop.f32.mrb[0].mxu0
        %803 = vdwg.mxu0
        %804 = vmatprep.subr.bf16.mxu0 0
        %805 = vmatpush1.bf16.msra.mxu0 %v654
        %806 = vmatprep.subr.bf16.mxu0 0
        %807 = vmatpush1.bf16.msra.mxu0 %v655
        %808 = vmatprep.subr.bf16.mxu0 0
        %809 = vmatpush1.bf16.msra.mxu0 %v656
        %810 = vmatprep.subr.bf16.mxu0 0
        %811 = vmatpush1.bf16.msra.mxu0 %v657
        %812 = vmatprep.subr.bf16.mxu0 0
        %813 = vmatpush1.bf16.msra.mxu0 %v658
        %814 = vmatprep.subr.bf16.mxu0 0
        %815 = vmatpush1.bf16.msra.mxu0 %v659
        %816 = vmatprep.subr.bf16.mxu0 0
        %817 = vmatpush1.bf16.msra.mxu0 %v660
        %818 = vmatprep.subr.bf16.mxu0 0
        %819 = vmatpush1.bf16.msra.mxu0 %v661
        %820 = vmatprep.subr.bf16.mxu0 0
        %821 = vmatpush1.bf16.msra.mxu0 %v662
        %822 = vmatprep.subr.bf16.mxu0 0
        %823 = vmatpush1.bf16.msra.mxu0 %v663
        %824 = vmatprep.subr.bf16.mxu0 0
        %825 = vmatpush1.bf16.msra.mxu0 %v664
        %826 = vmatprep.subr.bf16.mxu0 0
        %827 = vmatpush1.bf16.msra.mxu0 %v665
        %828 = vmatprep.subr.bf16.mxu0 0
        %829 = vmatpush1.bf16.msra.mxu0 %v666
        %830 = vmatprep.subr.bf16.mxu0 0
        %831 = vmatpush1.bf16.msra.mxu0 %v667
        %832 = vmatprep.subr.bf16.mxu0 0
        %833 = vmatpush1.bf16.msra.mxu0 %v668
        %834 = vmatprep.subr.bf16.mxu0 0
        %835 = vmatpush1.bf16.msra.mxu0 %v669
        %836 = vmatprep.mubr.bf16.mxu0 %v418
        %837 = vmatmul.mubr.bf16.gmra.mrb[0].mxu0 %v417
        %v838 = vpop.f32.mrb[0].mxu0
        %v839 = vadd.f32 %v799, %v838
        %v840 = vpop.f32.mrb[0].mxu0
        %v841 = vpop.f32.mrb[0].mxu0
        %v842 = vpop.f32.mrb[0].mxu0
        %843 = vdwg.mxu0
        %844 = vmatprep.subr.bf16.mxu0 0
        %845 = vmatpush1.bf16.msra.mxu0 %v670
        %846 = vmatprep.subr.bf16.mxu0 0
        %847 = vmatpush1.bf16.msra.mxu0 0
        %848 = vmatprep.subr.bf16.mxu0 0
        %849 = vmatpush1.bf16.msra.mxu0 0
        %850 = vmatprep.subr.bf16.mxu0 0
        %851 = vmatpush1.bf16.msra.mxu0 0
        %852 = vmatprep.subr.bf16.mxu0 0
        %853 = vmatpush1.bf16.msra.mxu0 0
        %854 = vmatprep.subr.bf16.mxu0 0
        %855 = vmatpush1.bf16.msra.mxu0 0
        %856 = vmatprep.subr.bf16.mxu0 0
        %857 = vmatpush1.bf16.msra.mxu0 0
        %858 = vmatprep.subr.bf16.mxu0 0
        %859 = vmatpush1.bf16.msra.mxu0 0
        %860 = vmatprep.subr.bf16.mxu0 0
        %861 = vmatpush1.bf16.msra.mxu0 0
        %862 = vmatprep.subr.bf16.mxu0 0
        %863 = vmatpush1.bf16.msra.mxu0 0
        %864 = vmatprep.subr.bf16.mxu0 0
        %865 = vmatpush1.bf16.msra.mxu0 0
        %866 = vmatprep.subr.bf16.mxu0 0
        %867 = vmatpush1.bf16.msra.mxu0 0
        %868 = vmatprep.subr.bf16.mxu0 0
        %869 = vmatpush1.bf16.msra.mxu0 0
        %870 = vmatprep.subr.bf16.mxu0 0
        %871 = vmatpush1.bf16.msra.mxu0 0
        %872 = vmatprep.subr.bf16.mxu0 0
        %873 = vmatpush1.bf16.msra.mxu0 0
        %874 = vmatprep.subr.bf16.mxu0 0
        %875 = vmatpush1.bf16.msra.mxu0 0
        %876 = vmatprep.mubr.bf16.mxu0 0
        %877 = vmatmul.mubr.bf16.gmra.mrb[0].mxu0 %v722
        %v878 = vpop.f32.mrb[0].mxu0
        %v879 = vadd.f32 %v839, %v878
        %v880 = vpop.f32.mrb[0].mxu0
        %v881 = vpop.f32.mrb[0].mxu0
        %v882 = vpop.f32.mrb[0].mxu0
        %883 = vdwg.mxu0
        %v884 = vmax.f32 %v879, 0.0
        %v885 = vpack.c.bf16 %v884, %v884
        %v886 = vld [vmem:[%s3] sm:$0xf]
        %v887 = vld [vmem:[%s3 + $0x4] sm:$0xf]
        %v888 = vld [vmem:[%s3 + $0x8] sm:$0xf]
        %v889 = vld [vmem:[%s3 + $0xc] sm:$0xf]
        %v890 = vld [vmem:[%s3 + $0x10] sm:$0xf]
        %v891 = vld [vmem:[%s3 + $0x14] sm:$0xf]
        %v892 = vld [vmem:[%s3 + $0x18] sm:$0xf]
        %v893 = vld [vmem:[%s3 + $0x1c] sm:$0xf]
        %v894 = vld [vmem:[%s3 + $0x20] sm:$0xf]
        %v895 = vld [vmem:[%s3 + $0x24] sm:$0xf]
        %v896 = vld [vmem:[%s3 + $0x28] sm:$0xf]
        %v897 = vld [vmem:[%s3 + $0x2c] sm:$0xf]
        %v898 = vld [vmem:[%s3 + $0x30] sm:$0xf]
        %v899 = vld [vmem:[%s3 + $0x34] sm:$0xf]
        %v900 = vld [vmem:[%s3 + $0x38] sm:$0xf]
        %v901 = vld [vmem:[%s3 + $0x3c] sm:$0xf]
        %v902 = vld [vmem:[%s4] sm:$0x1]
        %v904 = vlaneseq
        %v905 = vshrl.u32 %v904, 7
        %v906 = vsub.s32 0, %v905
        %v907 = vrot.slane %v902, %v906
        %v925 = vunpack.c.l.b16 %v886
        %v926 = vunpack.c.l.b16 %v887
        %v927 = vunpack.c.l.b16 %v888
        %v928 = vunpack.c.l.b16 %v889
        %v929 = vunpack.c.l.b16 %v890
        %v930 = vunpack.c.l.b16 %v891
        %v931 = vunpack.c.l.b16 %v892
        %v932 = vunpack.c.l.b16 %v893
        %v933 = vunpack.c.l.b16 %v894
        %v934 = vunpack.c.l.b16 %v895
        %v935 = vunpack.c.l.b16 %v896
        %v936 = vunpack.c.l.b16 %v897
        %v937 = vunpack.c.l.b16 %v898
        %v938 = vunpack.c.l.b16 %v899
        %v939 = vunpack.c.l.b16 %v900
        %v940 = vunpack.c.l.b16 %v901
        %v941 = vpack.c.b16 %v926, %v925
        %v942 = vpack.c.b16 %v928, %v927
        %v943 = vpack.c.b16 %v930, %v929
        %v944 = vpack.c.b16 %v932, %v931
        %v945 = vpack.c.b16 %v934, %v933
        %v946 = vpack.c.b16 %v936, %v935
        %v947 = vpack.c.b16 %v938, %v937
        %v948 = vpack.c.b16 %v940, %v939
        %957 = vmatprep.subr.bf16.mxu0 0
        %958 = vmatpush1.bf16.msra.mxu0 %v941
        %959 = vmatprep.subr.bf16.mxu0 0
        %960 = vmatpush1.bf16.msra.mxu0 %v942
        %961 = vmatprep.subr.bf16.mxu0 0
        %962 = vmatpush1.bf16.msra.mxu0 %v943
        %963 = vmatprep.subr.bf16.mxu0 0
        %964 = vmatpush1.bf16.msra.mxu0 %v944
        %965 = vmatprep.subr.bf16.mxu0 0
        %966 = vmatpush1.bf16.msra.mxu0 %v945
        %967 = vmatprep.subr.bf16.mxu0 0
        %968 = vmatpush1.bf16.msra.mxu0 %v946
        %969 = vmatprep.subr.bf16.mxu0 0
        %970 = vmatpush1.bf16.msra.mxu0 %v947
        %971 = vmatprep.subr.bf16.mxu0 0
        %972 = vmatpush1.bf16.msra.mxu0 %v948
        %973 = vmatprep.subr.bf16.mxu0 0
        %974 = vmatpush1.bf16.msra.mxu0 0
        %975 = vmatprep.subr.bf16.mxu0 0
        %976 = vmatpush1.bf16.msra.mxu0 0
        %977 = vmatprep.subr.bf16.mxu0 0
        %978 = vmatpush1.bf16.msra.mxu0 0
        %979 = vmatprep.subr.bf16.mxu0 0
        %980 = vmatpush1.bf16.msra.mxu0 0
        %981 = vmatprep.subr.bf16.mxu0 0
        %982 = vmatpush1.bf16.msra.mxu0 0
        %983 = vmatprep.subr.bf16.mxu0 0
        %984 = vmatpush1.bf16.msra.mxu0 0
        %985 = vmatprep.subr.bf16.mxu0 0
        %986 = vmatpush1.bf16.msra.mxu0 0
        %987 = vmatprep.subr.bf16.mxu0 0
        %988 = vmatpush1.bf16.msra.mxu0 0
        %989 = vmatprep.mubr.bf16.mxu0 0
        %990 = vmatmul.mubr.bf16.gmra.mrb[0].mxu0 %v885
        %v991 = vpop.f32.mrb[0].mxu0
        %v992 = vadd.f32 %v907, %v991
        %v993 = vpop.f32.mrb[0].mxu0
        %v994 = vpop.f32.mrb[0].mxu0
        %v995 = vpop.f32.mrb[0].mxu0
        %996 = vdwg.mxu0
        %v997 = vmax.f32 %v992, 0.0
        %v998 = vpack.c.bf16 %v997, %v997
        %v999 = vld [vmem:[%s5] sm:$0xf]
        %v1000 = vld [vmem:[%s5 + $0x4] sm:$0xf]
        %v1001 = vld [vmem:[%s5 + $0x8] sm:$0xf]
        %v1002 = vld [vmem:[%s5 + $0xc] sm:$0xf]
        %v1003 = vld [vmem:[%s5 + $0x10] sm:$0xf]
        %v1004 = vld [vmem:[%s5 + $0x14] sm:$0xf]
        %v1005 = vld [vmem:[%s5 + $0x18] sm:$0xf]
        %v1006 = vld [vmem:[%s5 + $0x1c] sm:$0xf]
        %v1007 = vld [vmem:[%s6] sm:$0x1]
        %v1009 = vlaneseq
        %v1010 = vshrl.u32 %v1009, 7
        %v1011 = vsub.s32 0, %v1010
        %v1012 = vrot.slane %v1007, %v1011
        %v1022 = vunpack.c.l.b16 %v999
        %v1023 = vunpack.c.l.b16 %v1000
        %v1024 = vunpack.c.l.b16 %v1001
        %v1025 = vunpack.c.l.b16 %v1002
        %v1026 = vunpack.c.l.b16 %v1003
        %v1027 = vunpack.c.l.b16 %v1004
        %v1028 = vunpack.c.l.b16 %v1005
        %v1029 = vunpack.c.l.b16 %v1006
        %v1030 = vpack.c.b16 %v1023, %v1022
        %v1031 = vpack.c.b16 %v1025, %v1024
        %v1032 = vpack.c.b16 %v1027, %v1026
        %v1033 = vpack.c.b16 %v1029, %v1028
        %vm1038 = vcmask 523264
        %v1040 = vsel %vm1038, %v998, 0
        %1042 = vmatprep.subr.bf16.mxu0 0
        %1043 = vmatpush1.bf16.msra.mxu0 %v1030
        %1044 = vmatprep.subr.bf16.mxu0 0
        %1045 = vmatpush1.bf16.msra.mxu0 %v1031
        %1046 = vmatprep.subr.bf16.mxu0 0
        %1047 = vmatpush1.bf16.msra.mxu0 %v1032
        %1048 = vmatprep.subr.bf16.mxu0 0
        %1049 = vmatpush1.bf16.msra.mxu0 %v1033
        %1050 = vmatprep.subr.bf16.mxu0 0
        %1051 = vmatpush1.bf16.msra.mxu0 0
        %1052 = vmatprep.subr.bf16.mxu0 0
        %1053 = vmatpush1.bf16.msra.mxu0 0
        %1054 = vmatprep.subr.bf16.mxu0 0
        %1055 = vmatpush1.bf16.msra.mxu0 0
        %1056 = vmatprep.subr.bf16.mxu0 0
        %1057 = vmatpush1.bf16.msra.mxu0 0
        %1058 = vmatprep.subr.bf16.mxu0 0
        %1059 = vmatpush1.bf16.msra.mxu0 0
        %1060 = vmatprep.subr.bf16.mxu0 0
        %1061 = vmatpush1.bf16.msra.mxu0 0
        %1062 = vmatprep.subr.bf16.mxu0 0
        %1063 = vmatpush1.bf16.msra.mxu0 0
        %1064 = vmatprep.subr.bf16.mxu0 0
        %1065 = vmatpush1.bf16.msra.mxu0 0
        %1066 = vmatprep.subr.bf16.mxu0 0
        %1067 = vmatpush1.bf16.msra.mxu0 0
        %1068 = vmatprep.subr.bf16.mxu0 0
        %1069 = vmatpush1.bf16.msra.mxu0 0
        %1070 = vmatprep.subr.bf16.mxu0 0
        %1071 = vmatpush1.bf16.msra.mxu0 0
        %1072 = vmatprep.subr.bf16.mxu0 0
        %1073 = vmatpush1.bf16.msra.mxu0 0
        %1074 = vmatprep.mubr.bf16.mxu0 0
        %1075 = vmatmul.mubr.bf16.gmra.mrb[0].mxu0 %v1040
        %v1076 = vpop.f32.mrb[0].mxu0
        %v1077 = vadd.f32 %v1012, %v1076
        %v1078 = vpop.f32.mrb[0].mxu0
        %v1079 = vpop.f32.mrb[0].mxu0
        %v1080 = vpop.f32.mrb[0].mxu0
        %1081 = vdwg.mxu0
        %vm1082 = vcmask 80896
        %v1083 = vsel %vm1082, %v1077, -inf
        %1084 = vmax.xlane.f32.xlu0 %v1083
        %v1085 = vpop.xlane.xlu0 %1084
        %v1086 = vsub.f32 %v1077, %v1085
        %v1087 = vmul.f32 %v1086, 1.442695
        %v1088 = vpow.pop %v1087
        %v1089 = vsel %vm1082, %v1088, 0.0
        %1090 = vadd.xlane.f32.xlu0 %v1089
        %v1091 = vpop.xlane.xlu0 %1090
        %v1092 = vlog2.pop %v1091
        %v1093 = vmul.f32 %v1092, 0.6931472
        %v1094 = vsub.f32 %v1086, %v1093
        %1095 = vst.msk [vmem:[%s291] sm:$0xff] %vm1082, %v1094
        %p1096 = scmp.lt.s32.totalorder %s19, 3
        %s1097 = scalar_select %p1096, %s19, 3
        %s1098 = smul.addr %s1097, 8
        %s1099 = scalar_lea.vmem %s7, %s1098
        // Predicated region
        $region53: #{tpu_custom_call.1} parent=47 // pred_check
          %p1100 = pneg %p189
        $region54: #{tpu_custom_call.1} parent=47 // pred_check_branch
          %1102 = sbr.rel (%p1100) target = $region56
        $region55: #{tpu_custom_call.1} parent=47 // pred_region
          _
        $region56: #{tpu_custom_call.1} parent=47 // pred_fallthru
          _
      $region48: #{tpu_custom_call.1} parent=5 // pred_fallthru
        _
      %p1103 = scmp.le.s32.totalorder 2, %s14
      // Predicated region
      $region57: #{tpu_custom_call.1} parent=5 // pred_check
        %p1104 = pneg %p1103
      $region58: #{tpu_custom_call.1} parent=5 // pred_check_branch
        %1106 = sbr.rel (%p1104) target = $region60
      $region59: #{tpu_custom_call.1} parent=5 // pred_region
        %s1107 = ssub.s32 %s14, 2
        // Predicated region
        $region61: #{tpu_custom_call.1} parent=59 // pred_check
          %p1108 = pneg %p195
        $region62: #{tpu_custom_call.1} parent=59 // pred_check_branch
          %1110 = sbr.rel (%p1108) target = $region64
        $region63: #{tpu_custom_call.1} parent=59 // pred_region
          %p1111 = scmp.lt.s32.totalorder %s20, 3
          %s1112 = scalar_select %p1111, %s20, 3
          %s1113 = smul.addr %s1112, 8
          %s1114 = scalar_lea.vmem %s7, %s1113
        $region64: #{tpu_custom_call.1} parent=59 // pred_fallthru
          _
      $region60: #{tpu_custom_call.1} parent=5 // pred_fallthru
        _
    $region6: #{tpu_custom_call.1} parent=1 // loop_footer
      %s18 = sadd.s32 1, %s14
    $region7: #{tpu_custom_call.1} parent=1 // loop_footer_branch
      %13 = sbr.rel target = $region3
    $region8: #{tpu_custom_call.1} parent=1 // loop_exit
      _
    %1115 = vsyncpa [#allocation3], 1
    %s1116 = scalar_lea.sflag [#allocation3], 1
    %1117 = vsyncpa %s1116, 1

// kernel: tpu_custom_call.1
$region0: #{tpu_custom_call.1}
  #allocation0 [shape = 'u32[]', space=smem, size = 0x4, offset = 0x4, fixed_abs, tag = 'smem constant byte address 0x4 - core index']
  #allocation1 [shape = 'u32[144,128]{1,0:T(1,128)}', space=vmem, size = 0x12000, scoped, tag = 'internal scratch']
  %s0 = inlined_call_operand.vmem [shape: bf16[32,784], index: 0, kind: input, shape index: {}]
  %s1 = inlined_call_operand.hbm [shape: bf16[784,128], index: 1, kind: input, shape index: {}]
  %s2 = inlined_call_operand.vmem [shape: f32[1,128], index: 2, kind: input, shape index: {}]
  %s3 = inlined_call_operand.vmem [shape: bf16[128,64], index: 3, kind: input, shape index: {}]
  %s4 = inlined_call_operand.vmem [shape: f32[1,64], index: 4, kind: input, shape index: {}]
  %s5 = inlined_call_operand.vmem [shape: bf16[64,10], index: 5, kind: input, shape index: {}]
  %s6 = inlined_call_operand.vmem [shape: f32[1,10], index: 6, kind: input, shape index: {}]
  %s7 = inlined_call_operand.vmem [shape: f32[32,10], index: 7, kind: output, shape index: {}]
  %s8 = sld [smem:[#allocation0]]
  $region65: #{tpu_custom_call.1} parent=0
    _
  %s10 = ssub.s32 1, %s8
  %s11 = scalar_select 0, %s10, %s8
  $region1: #{tpu_custom_call.1} parent=0
    #allocation2 [shape = 'u8[200704]{0}', space=vmem, size = 0x31000, scoped, tag = 'input window, operand 1, single buffered']
    #allocation3 [shape = 's32[2]{0}', space=sflag, size = 0x8, scoped, tag = 'scoped memory for tpu_custom_call.1']
    %12 = vsyncpa [#allocation3], 0
    loop: start=0, step=1, limit=6
    $region2: #{tpu_custom_call.1} parent=1 // loop_pre_header
      _
    $region3: #{tpu_custom_call.1} parent=1 // loop_header
      %s14 = sphi 0, %s18
      %p15 = scmp.ge.s32.totalorder %s14, 6
      %s24 = sphi 0, %s26
      %s27 = sphi 0, %s24
      %s28 = sphi 0, %s27
      %s44 = sphi 0, %s28
      %s48 = sphi 0, %s48
      %s50 = sphi 0, %s48
      %s51 = sphi 0, %s50
      %s65 = sphi 0, %s51
      %s69 = sphi 0, %s69
      %s71 = sphi 0, %s69
      %s72 = sphi 0, %s71
      %s86 = sphi 0, %s72
      %s90 = sphi 0, %s90
      %s92 = sphi 0, %s90
      %s93 = sphi 0, %s92
      %s107 = sphi 0, %s93
      %s111 = sphi 0, %s111
      %s113 = sphi 0, %s111
      %s114 = sphi 0, %s113
      %s128 = sphi 0, %s114
      %s132 = sphi 0, %s132
      %s134 = sphi 0, %s132
      %s135 = sphi 0, %s134
      %s149 = sphi 0, %s135
      %s153 = sphi 0, %s153
      %s155 = sphi 0, %s153
      %s156 = sphi 0, %s155
      %s170 = sphi 0, %s156
      %s176 = sphi 0, %s178
      %s179 = sphi 0, %s176
      %s180 = sphi 0, %s179
      %s196 = sphi 0, %s180
    $region4: #{tpu_custom_call.1} parent=1 // loop_header_branch
      %17 = sbr.rel (%p15) target = $region8
    $region5: #{tpu_custom_call.1} parent=1 // loop_body
      %s19 = ssub.s32 %s14, 1
      %s20 = ssub.s32 %s14, 2
      %s21 = sadd.s32 %s14, 1
      %s22 = ssub.s32 %s14, %s21
      %p23 = scmp.eq.s32.totalorder %s22, 0
      %s25 = sadd.s32 %s24, 1
      %s26 = scalar_select %p23, %s24, %s25
      %p29 = pneg %p23
      %p30 = scmp.eq.s32.totalorder %s14, 3
      %p31 = por %p29, %p30
      %p32 = scmp.ne.s32.totalorder %s24, %s27
      %p33 = scmp.eq.s32.totalorder %s14, 0
      %p34 = por %p32, %p33
      %p35 = scmp.ne.s32.totalorder %s24, %s27
      %p36 = scmp.eq.s32.totalorder %s19, 3
      %p37 = por %p35, %p36
      %p38 = scmp.ne.s32.totalorder %s27, %s28
      %p39 = scmp.eq.s32.totalorder %s19, 0
      %p40 = por %p38, %p39
      %p41 = scmp.ne.s32.totalorder %s27, %s28
      %p42 = scmp.eq.s32.totalorder %s20, 3
      %p43 = por %p41, %p42
      %p45 = scmp.ne.s32.totalorder %s28, %s44
      %p46 = scmp.eq.s32.totalorder %s20, 0
      %p47 = por %p45, %p46
      %s49 = sadd.s32 %s48, 1
      %p52 = scmp.eq.s32.totalorder %s14, 3
      %p53 = scmp.ne.s32.totalorder %s48, %s50
      %p54 = scmp.eq.s32.totalorder %s14, 0
      %p55 = por %p53, %p54
      %p56 = scmp.ne.s32.totalorder %s48, %s50
      %p57 = scmp.eq.s32.totalorder %s19, 3
      %p58 = por %p56, %p57
      %p59 = scmp.ne.s32.totalorder %s50, %s51
      %p60 = scmp.eq.s32.totalorder %s19, 0
      %p61 = por %p59, %p60
      %p62 = scmp.ne.s32.totalorder %s50, %s51
      %p63 = scmp.eq.s32.totalorder %s20, 3
      %p64 = por %p62, %p63
      %p66 = scmp.ne.s32.totalorder %s51, %s65
      %p67 = scmp.eq.s32.totalorder %s20, 0
      %p68 = por %p66, %p67
      %s70 = sadd.s32 %s69, 1
      %p73 = scmp.eq.s32.totalorder %s14, 3
      %p74 = scmp.ne.s32.totalorder %s69, %s71
      %p75 = scmp.eq.s32.totalorder %s14, 0
      %p76 = por %p74, %p75
      %p77 = scmp.ne.s32.totalorder %s69, %s71
      %p78 = scmp.eq.s32.totalorder %s19, 3
      %p79 = por %p77, %p78
      %p80 = scmp.ne.s32.totalorder %s71, %s72
      %p81 = scmp.eq.s32.totalorder %s19, 0
      %p82 = por %p80, %p81
      %p83 = scmp.ne.s32.totalorder %s71, %s72
      %p84 = scmp.eq.s32.totalorder %s20, 3
      %p85 = por %p83, %p84
      %p87 = scmp.ne.s32.totalorder %s72, %s86
      %p88 = scmp.eq.s32.totalorder %s20, 0
      %p89 = por %p87, %p88
      %s91 = sadd.s32 %s90, 1
      %p94 = scmp.eq.s32.totalorder %s14, 3
      %p95 = scmp.ne.s32.totalorder %s90, %s92
      %p96 = scmp.eq.s32.totalorder %s14, 0
      %p97 = por %p95, %p96
      %p98 = scmp.ne.s32.totalorder %s90, %s92
      %p99 = scmp.eq.s32.totalorder %s19, 3
      %p100 = por %p98, %p99
      %p101 = scmp.ne.s32.totalorder %s92, %s93
      %p102 = scmp.eq.s32.totalorder %s19, 0
      %p103 = por %p101, %p102
      %p104 = scmp.ne.s32.totalorder %s92, %s93
      %p105 = scmp.eq.s32.totalorder %s20, 3
      %p106 = por %p104, %p105
      %p108 = scmp.ne.s32.totalorder %s93, %s107
      %p109 = scmp.eq.s32.totalorder %s20, 0
      %p110 = por %p108, %p109
      %s112 = sadd.s32 %s111, 1
      %p115 = scmp.eq.s32.totalorder %s14, 3
      %p116 = scmp.ne.s32.totalorder %s111, %s113
      %p117 = scmp.eq.s32.totalorder %s14, 0
      %p118 = por %p116, %p117
      %p119 = scmp.ne.s32.totalorder %s111, %s113
      %p120 = scmp.eq.s32.totalorder %s19, 3
      %p121 = por %p119, %p120
      %p122 = scmp.ne.s32.totalorder %s113, %s114
      %p123 = scmp.eq.s32.totalorder %s19, 0
      %p124 = por %p122, %p123
      %p125 = scmp.ne.s32.totalorder %s113, %s114
      %p126 = scmp.eq.s32.totalorder %s20, 3
      %p127 = por %p125, %p126
      %p129 = scmp.ne.s32.totalorder %s114, %s128
      %p130 = scmp.eq.s32.totalorder %s20, 0
      %p131 = por %p129, %p130
      %s133 = sadd.s32 %s132, 1
      %p136 = scmp.eq.s32.totalorder %s14, 3
      %p137 = scmp.ne.s32.totalorder %s132, %s134
      %p138 = scmp.eq.s32.totalorder %s14, 0
      %p139 = por %p137, %p138
      %p140 = scmp.ne.s32.totalorder %s132, %s134
      %p141 = scmp.eq.s32.totalorder %s19, 3
      %p142 = por %p140, %p141
      %p143 = scmp.ne.s32.totalorder %s134, %s135
      %p144 = scmp.eq.s32.totalorder %s19, 0
      %p145 = por %p143, %p144
      %p146 = scmp.ne.s32.totalorder %s134, %s135
      %p147 = scmp.eq.s32.totalorder %s20, 3
      %p148 = por %p146, %p147
      %p150 = scmp.ne.s32.totalorder %s135, %s149
      %p151 = scmp.eq.s32.totalorder %s20, 0
      %p152 = por %p150, %p151
      %s154 = sadd.s32 %s153, 1
      %p157 = scmp.eq.s32.totalorder %s14, 3
      %p158 = scmp.ne.s32.totalorder %s153, %s155
      %p159 = scmp.eq.s32.totalorder %s14, 0
      %p160 = por %p158, %p159
      %p161 = scmp.ne.s32.totalorder %s153, %s155
      %p162 = scmp.eq.s32.totalorder %s19, 3
      %p163 = por %p161, %p162
      %p164 = scmp.ne.s32.totalorder %s155, %s156
      %p165 = scmp.eq.s32.totalorder %s19, 0
      %p166 = por %p164, %p165
      %p167 = scmp.ne.s32.totalorder %s155, %s156
      %p168 = scmp.eq.s32.totalorder %s20, 3
      %p169 = por %p167, %p168
      %p171 = scmp.ne.s32.totalorder %s156, %s170
      %p172 = scmp.eq.s32.totalorder %s20, 0
      %p173 = por %p171, %p172
      %s174 = ssub.s32 %s14, %s21
      %p175 = scmp.eq.s32.totalorder %s174, 0
      %s177 = sadd.s32 %s176, 1
      %s178 = scalar_select %p175, %s176, %s177
      %p181 = pneg %p175
      %p182 = scmp.eq.s32.totalorder %s14, 3
      %p183 = por %p181, %p182
      %p184 = scmp.ne.s32.totalorder %s176, %s179
      %p185 = scmp.eq.s32.totalorder %s14, 0
      %p186 = por %p184, %p185
      %p187 = scmp.ne.s32.totalorder %s176, %s179
      %p188 = scmp.eq.s32.totalorder %s19, 3
      %p189 = por %p187, %p188
      %p190 = scmp.ne.s32.totalorder %s179, %s180
      %p191 = scmp.eq.s32.totalorder %s19, 0
      %p192 = por %p190, %p191
      %p193 = scmp.ne.s32.totalorder %s179, %s180
      %p194 = scmp.eq.s32.totalorder %s20, 3
      %p195 = por %p193, %p194
      %p197 = scmp.ne.s32.totalorder %s180, %s196
      %p198 = scmp.eq.s32.totalorder %s20, 0
      %p199 = por %p197, %p198
      %p200 = scmp.le.s32.totalorder 1, %s14
      %p201 = scmp.lt.s32.totalorder %s14, 5
      %p202 = pnand %p200, %p201
      %p203 = pneg %p202
      // Predicated region
      $region9: #{tpu_custom_call.1} parent=5 // pred_check
        _
      $region10: #{tpu_custom_call.1} parent=5 // pred_check_branch
        %205 = sbr.rel (%p202) target = $region12
      $region11: #{tpu_custom_call.1} parent=5 // pred_region
        %s206 = ssub.s32 %s14, 1
        // Predicated region
        $region13: #{tpu_custom_call.1} parent=11 // pred_check
          %p207 = pneg %p61
        $region14: #{tpu_custom_call.1} parent=11 // pred_check_branch
          %209 = sbr.rel (%p207) target = $region16
        $region15: #{tpu_custom_call.1} parent=11 // pred_region
          %s211 = ssub.s32 6272, 6272
          %212 = vsyncadd [#allocation3], %s211
          %s213 = sshll.u32 [#allocation2], 4
          %s214 = int_to_ptr.vmem [resolvable:$true] %s213
          %219 = dma.hbm_to_vmem [thread:$0]  %s1, 6272, %s214, [#allocation3], 64, 64, 4
        $region16: #{tpu_custom_call.1} parent=11 // pred_fallthru
          _
        // Predicated region
        $region17: #{tpu_custom_call.1} parent=11 // pred_check
          %p220 = pneg %p82
        $region18: #{tpu_custom_call.1} parent=11 // pred_check_branch
          %222 = sbr.rel (%p220) target = $region20
        $region19: #{tpu_custom_call.1} parent=11 // pred_region
          _
        $region20: #{tpu_custom_call.1} parent=11 // pred_fallthru
          _
        // Predicated region
        $region21: #{tpu_custom_call.1} parent=11 // pred_check
          %p223 = pneg %p103
        $region22: #{tpu_custom_call.1} parent=11 // pred_check_branch
          %225 = sbr.rel (%p223) target = $region24
        $region23: #{tpu_custom_call.1} parent=11 // pred_region
          _
        $region24: #{tpu_custom_call.1} parent=11 // pred_fallthru
          _
        // Predicated region
        $region25: #{tpu_custom_call.1} parent=11 // pred_check
          %p226 = pneg %p124
        $region26: #{tpu_custom_call.1} parent=11 // pred_check_branch
          %228 = sbr.rel (%p226) target = $region28
        $region27: #{tpu_custom_call.1} parent=11 // pred_region
          _
        $region28: #{tpu_custom_call.1} parent=11 // pred_fallthru
          _
        // Predicated region
        $region29: #{tpu_custom_call.1} parent=11 // pred_check
          %p229 = pneg %p145
        $region30: #{tpu_custom_call.1} parent=11 // pred_check_branch
          %231 = sbr.rel (%p229) target = $region32
        $region31: #{tpu_custom_call.1} parent=11 // pred_region
          _
        $region32: #{tpu_custom_call.1} parent=11 // pred_fallthru
          _
        // Predicated region
        $region33: #{tpu_custom_call.1} parent=11 // pred_check
          %p232 = pneg %p166
        $region34: #{tpu_custom_call.1} parent=11 // pred_check_branch
          %234 = sbr.rel (%p232) target = $region36
        $region35: #{tpu_custom_call.1} parent=11 // pred_region
          _
        $region36: #{tpu_custom_call.1} parent=11 // pred_fallthru
          _
      $region12: #{tpu_custom_call.1} parent=5 // pred_fallthru
        _
      %p235 = scmp.lt.s32.totalorder %s14, 4
      // Predicated region
      $region37: #{tpu_custom_call.1} parent=5 // pred_check
        %p236 = pneg %p235
      $region38: #{tpu_custom_call.1} parent=5 // pred_check_branch
        %238 = sbr.rel (%p236) target = $region40
      $region39: #{tpu_custom_call.1} parent=5 // pred_region
        // Predicated region
        $region41: #{tpu_custom_call.1} parent=39 // pred_check
          %p239 = pneg %p34
        $region42: #{tpu_custom_call.1} parent=39 // pred_check_branch
          %241 = sbr.rel (%p239) target = $region44
        $region43: #{tpu_custom_call.1} parent=39 // pred_region
          %p242 = scmp.lt.s32.totalorder %s14, 3
          %s243 = scalar_select %p242, %s14, 3
          %s244 = smul.addr %s243, 7
          %s245 = smul.addr %s244, 4
          %s246 = scalar_lea.vmem %s0, %s245
        $region44: #{tpu_custom_call.1} parent=39 // pred_fallthru
          _
      $region40: #{tpu_custom_call.1} parent=5 // pred_fallthru
        _
      %p247 = scmp.le.s32.totalorder 1, %s14
      %p248 = scmp.lt.s32.totalorder %s14, 5
      %p249 = pnand %p247, %p248
      %p250 = pneg %p249
      // Predicated region
      $region45: #{tpu_custom_call.1} parent=5 // pred_check
        _
      $region46: #{tpu_custom_call.1} parent=5 // pred_check_branch
        %252 = sbr.rel (%p249) target = $region48
      $region47: #{tpu_custom_call.1} parent=5 // pred_region
        %s253 = ssub.s32 %s14, 1
        // Predicated region
        $region49: #{tpu_custom_call.1} parent=47 // pred_check
          %p254 = pneg %p61
        $region50: #{tpu_custom_call.1} parent=47 // pred_check_branch
          %256 = sbr.rel (%p254) target = $region52
        $region51: #{tpu_custom_call.1} parent=47 // pred_region
          %257 = dma.done [#allocation3], 6272
        $region52: #{tpu_custom_call.1} parent=47 // pred_fallthru
          _
        %p258 = scmp.lt.s32.totalorder %s19, 3
        %s259 = scalar_select %p258, %s19, 3
        %s260 = smul.addr %s259, 7
        %s261 = smul.addr %s260, 4
        %s262 = scalar_lea.vmem %s0, %s261
        %p263 = pneg %p40
        %p264 = pneg %p37
        %p265 = pneg %p61
        %p266 = pneg %p58
        %p267 = pneg %p82
        %p268 = pneg %p79
        %p269 = pneg %p103
        %p270 = pneg %p100
        %p271 = pneg %p124
        %p272 = pneg %p121
        %p273 = pneg %p145
        %p274 = pneg %p142
        %p275 = pneg %p166
        %p276 = pneg %p163
        %p277 = pneg %p192
        %p278 = pneg %p189
        %p279 = scmp.lt.s32.totalorder %s19, 3
        %s280 = scalar_select %p279, %s19, 3
        %s281 = smul.addr %s280, 8
        %s282 = scalar_lea.vmem %s7, %s281
        %p283 = scmp.lt.s32.totalorder %s19, 3
        %s284 = scalar_select %p283, %s19, 3
        %s285 = smul.addr %s284, 7
        %s286 = smul.addr %s285, 4
        %s287 = scalar_lea.vmem %s0, %s286
        %p288 = scmp.lt.s32.totalorder %s19, 3
        %s289 = scalar_select %p288, %s19, 3
        %s290 = smul.addr %s289, 8
        %s291 = scalar_lea.vmem %s7, %s290
        %v293 = vld [vmem:[%s287] sm:$0xff]
        %v294 = vld [vmem:[%s287 + $0x8] sm:$0xff]
        %v295 = vld [vmem:[%s287 + $0x10] sm:$0xff]
        %v296 = vld [vmem:[%s287 + $0x18] sm:$0xf]
        %v297 = vld [vmem:[#allocation2] sm:$0xf]
        %v298 = vld [vmem:[#allocation2 + $0x4] sm:$0xf]
        %v299 = vld [vmem:[#allocation2 + $0x8] sm:$0xf]
        %v300 = vld [vmem:[#allocation2 + $0xc] sm:$0xf]
        %v301 = vld [vmem:[#allocation2 + $0x10] sm:$0xf]
        %v302 = vld [vmem:[#allocation2 + $0x14] sm:$0xf]
        %v303 = vld [vmem:[#allocation2 + $0x18] sm:$0xf]
        %v304 = vld [vmem:[#allocation2 + $0x1c] sm:$0xf]
        %v305 = vld [vmem:[#allocation2 + $0x20] sm:$0xf]
        %v306 = vld [vmem:[#allocation2 + $0x24] sm:$0xf]
        %v307 = vld [vmem:[#allocation2 + $0x28] sm:$0xf]
        %v308 = vld [vmem:[#allocation2 + $0x2c] sm:$0xf]
        %v309 = vld [vmem:[#allocation2 + $0x30] sm:$0xf]
        %v310 = vld [vmem:[#allocation2 + $0x34] sm:$0xf]
        %v311 = vld [vmem:[#allocation2 + $0x38] sm:$0xf]
        %v312 = vld [vmem:[#allocation2 + $0x3c] sm:$0xf]
        %v313 = vld [vmem:[#allocation2 + $0x40] sm:$0xf]
        %v314 = vld [vmem:[#allocation2 + $0x44] sm:$0xf]
        %v315 = vld [vmem:[#allocation2 + $0x48] sm:$0xf]
        %v316 = vld [vmem:[#allocation2 + $0x4c] sm:$0xf]
        %v317 = vld [vmem:[#allocation2 + $0x50] sm:$0xf]
        %v318 = vld [vmem:[#allocation2 + $0x54] sm:$0xf]
        %v319 = vld [vmem:[#allocation2 + $0x58] sm:$0xf]
        %v320 = vld [vmem:[#allocation2 + $0x5c] sm:$0xf]
        %v321 = vld [vmem:[#allocation2 + $0x60] sm:$0xf]
        %v322 = vld [vmem:[#allocation2 + $0x64] sm:$0xf]
        %v323 = vld [vmem:[#allocation2 + $0x68] sm:$0xf]
        %v324 = vld [vmem:[#allocation2 + $0x6c] sm:$0xf]
        %v325 = vld [vmem:[#allocation2 + $0x70] sm:$0xf]
        %v326 = vld [vmem:[#allocation2 + $0x74] sm:$0xf]
        %v327 = vld [vmem:[#allocation2 + $0x78] sm:$0xf]
        %v328 = vld [vmem:[#allocation2 + $0x7c] sm:$0xf]
        %v329 = vld [vmem:[#allocation2 + $0x80] sm:$0xf]
        %v330 = vld [vmem:[#allocation2 + $0x84] sm:$0xf]
        %v331 = vld [vmem:[#allocation2 + $0x88] sm:$0xf]
        %v332 = vld [vmem:[#allocation2 + $0x8c] sm:$0xf]
        %v333 = vld [vmem:[#allocation2 + $0x90] sm:$0xf]
        %v334 = vld [vmem:[#allocation2 + $0x94] sm:$0xf]
        %v335 = vld [vmem:[#allocation2 + $0x98] sm:$0xf]
        %v336 = vld [vmem:[#allocation2 + $0x9c] sm:$0xf]
        %v337 = vld [vmem:[#allocation2 + $0xa0] sm:$0xf]
        %v338 = vld [vmem:[#allocation2 + $0xa4] sm:$0xf]
        %v339 = vld [vmem:[#allocation2 + $0xa8] sm:$0xf]
        %v340 = vld [vmem:[#allocation2 + $0xac] sm:$0xf]
        %v341 = vld [vmem:[#allocation2 + $0xb0] sm:$0xf]
        %v342 = vld [vmem:[#allocation2 + $0xb4] sm:$0xf]
        %v343 = vld [vmem:[#allocation2 + $0xb8] sm:$0xf]
        %v344 = vld [vmem:[#allocation2 + $0xbc] sm:$0xf]
        %v345 = vld [vmem:[#allocation2 + $0xc0] sm:$0xf]
        %v346 = vld [vmem:[#allocation2 + $0xc4] sm:$0xf]
        %v347 = vld [vmem:[#allocation2 + $0xc8] sm:$0xf]
        %v348 = vld [vmem:[#allocation2 + $0xcc] sm:$0xf]
        %v349 = vld [vmem:[#allocation2 + $0xd0] sm:$0xf]
        %v350 = vld [vmem:[#allocation2 + $0xd4] sm:$0xf]
        %v351 = vld [vmem:[#allocation2 + $0xd8] sm:$0xf]
        %v352 = vld [vmem:[#allocation2 + $0xdc] sm:$0xf]
        %v353 = vld [vmem:[#allocation2 + $0xe0] sm:$0xf]
        %v354 = vld [vmem:[#allocation2 + $0xe4] sm:$0xf]
        %v355 = vld [vmem:[#allocation2 + $0xe8] sm:$0xf]
        %v356 = vld [vmem:[#allocation2 + $0xec] sm:$0xf]
        %v357 = vld [vmem:[#allocation2 + $0xf0] sm:$0xf]
        %v358 = vld [vmem:[#allocation2 + $0xf4] sm:$0xf]
        %v359 = vld [vmem:[#allocation2 + $0xf8] sm:$0xf]
        %v360 = vld [vmem:[#allocation2 + $0xfc] sm:$0xf]
        %v361 = vld [vmem:[#allocation2 + $0x100] sm:$0xf]
        %v362 = vld [vmem:[#allocation2 + $0x104] sm:$0xf]
        %v363 = vld [vmem:[#allocation2 + $0x108] sm:$0xf]
        %v364 = vld [vmem:[#allocation2 + $0x10c] sm:$0xf]
        %v365 = vld [vmem:[#allocation2 + $0x110] sm:$0xf]
        %v366 = vld [vmem:[#allocation2 + $0x114] sm:$0xf]
        %v367 = vld [vmem:[#allocation2 + $0x118] sm:$0xf]
        %v368 = vld [vmem:[#allocation2 + $0x11c] sm:$0xf]
        %v369 = vld [vmem:[#allocation2 + $0x120] sm:$0xf]
        %v370 = vld [vmem:[#allocation2 + $0x124] sm:$0xf]
        %v371 = vld [vmem:[#allocation2 + $0x128] sm:$0xf]
        %v372 = vld [vmem:[#allocation2 + $0x12c] sm:$0xf]
        %v373 = vld [vmem:[#allocation2 + $0x130] sm:$0xf]
        %v374 = vld [vmem:[#allocation2 + $0x134] sm:$0xf]
        %v375 = vld [vmem:[#allocation2 + $0x138] sm:$0xf]
        %v376 = vld [vmem:[#allocation2 + $0x13c] sm:$0xf]
        %v377 = vld [vmem:[#allocation2 + $0x140] sm:$0xf]
        %v378 = vld [vmem:[#allocation2 + $0x144] sm:$0xf]
        %v379 = vld [vmem:[#allocation2 + $0x148] sm:$0xf]
        %v380 = vld [vmem:[#allocation2 + $0x14c] sm:$0xf]
        %v381 = vld [vmem:[#allocation2 + $0x150] sm:$0xf]
        %v382 = vld [vmem:[#allocation2 + $0x154] sm:$0xf]
        %v383 = vld [vmem:[#allocation2 + $0x158] sm:$0xf]
        %v384 = vld [vmem:[#allocation2 + $0x15c] sm:$0xf]
        %v385 = vld [vmem:[#allocation2 + $0x160] sm:$0xf]
        %v386 = vld [vmem:[#allocation2 + $0x164] sm:$0xf]
        %v387 = vld [vmem:[#allocation2 + $0x168] sm:$0xf]
        %v388 = vld [vmem:[#allocation2 + $0x16c] sm:$0xf]
        %v389 = vld [vmem:[#allocation2 + $0x170] sm:$0xf]
        %v390 = vld [vmem:[#allocation2 + $0x174] sm:$0xf]
        %v391 = vld [vmem:[#allocation2 + $0x178] sm:$0xf]
        %v392 = vld [vmem:[#allocation2 + $0x17c] sm:$0xf]
        %v393 = vld [vmem:[#allocation2 + $0x180] sm:$0xf]
        %v394 = vld [vmem:[#allocation2 + $0x184] sm:$0xf]
        %v395 = vld [vmem:[%s2] sm:$0x1]
        %v397 = vlaneseq
        %v398 = vshrl.u32 %v397, 7
        %v399 = vsub.s32 0, %v398
        %v400 = vrot.slane %v395, %v399
        %v406 = vunpack.c.l.b16 %v293
        %v407 = vunpack.c.h.b16 %v293
        %v408 = vunpack.c.l.b16 %v294
        %v409 = vunpack.c.h.b16 %v294
        %v410 = vunpack.c.l.b16 %v295
        %v411 = vunpack.c.h.b16 %v295
        %v412 = vunpack.c.l.b16 %v296
        %v413 = vpack.c.b16 %v406, %v406
        %v414 = vpack.c.b16 %v407, %v407
        %v415 = vpack.c.b16 %v408, %v408
        %v416 = vpack.c.b16 %v409, %v409
        %v417 = vpack.c.b16 %v410, %v410
        %v418 = vpack.c.b16 %v411, %v411
        %v419 = vpack.c.b16 %v412, %v412
        %v524 = vunpack.c.l.b16 %v297
        %v525 = vunpack.c.l.b16 %v298
        %v526 = vunpack.c.l.b16 %v299
        %v527 = vunpack.c.l.b16 %v300
        %v528 = vunpack.c.l.b16 %v301
        %v529 = vunpack.c.l.b16 %v302
        %v530 = vunpack.c.l.b16 %v303
        %v531 = vunpack.c.l.b16 %v304
        %v532 = vunpack.c.l.b16 %v305
        %v533 = vunpack.c.l.b16 %v306
        %v534 = vunpack.c.l.b16 %v307
        %v535 = vunpack.c.l.b16 %v308
        %v536 = vunpack.c.l.b16 %v309
        %v537 = vunpack.c.l.b16 %v310
        %v538 = vunpack.c.l.b16 %v311
        %v539 = vunpack.c.l.b16 %v312
        %v540 = vunpack.c.l.b16 %v313
        %v541 = vunpack.c.l.b16 %v314
        %v542 = vunpack.c.l.b16 %v315
        %v543 = vunpack.c.l.b16 %v316
        %v544 = vunpack.c.l.b16 %v317
        %v545 = vunpack.c.l.b16 %v318
        %v546 = vunpack.c.l.b16 %v319
        %v547 = vunpack.c.l.b16 %v320
        %v548 = vunpack.c.l.b16 %v321
        %v549 = vunpack.c.l.b16 %v322
        %v550 = vunpack.c.l.b16 %v323
        %v551 = vunpack.c.l.b16 %v324
        %v552 = vunpack.c.l.b16 %v325
        %v553 = vunpack.c.l.b16 %v326
        %v554 = vunpack.c.l.b16 %v327
        %v555 = vunpack.c.l.b16 %v328
        %v556 = vunpack.c.l.b16 %v329
        %v557 = vunpack.c.l.b16 %v330
        %v558 = vunpack.c.l.b16 %v331
        %v559 = vunpack.c.l.b16 %v332
        %v560 = vunpack.c.l.b16 %v333
        %v561 = vunpack.c.l.b16 %v334
        %v562 = vunpack.c.l.b16 %v335
        %v563 = vunpack.c.l.b16 %v336
        %v564 = vunpack.c.l.b16 %v337
        %v565 = vunpack.c.l.b16 %v338
        %v566 = vunpack.c.l.b16 %v339
        %v567 = vunpack.c.l.b16 %v340
        %v568 = vunpack.c.l.b16 %v341
        %v569 = vunpack.c.l.b16 %v342
        %v570 = vunpack.c.l.b16 %v343
        %v571 = vunpack.c.l.b16 %v344
        %v572 = vunpack.c.l.b16 %v345
        %v573 = vunpack.c.l.b16 %v346
        %v574 = vunpack.c.l.b16 %v347
        %v575 = vunpack.c.l.b16 %v348
        %v576 = vunpack.c.l.b16 %v349
        %v577 = vunpack.c.l.b16 %v350
        %v578 = vunpack.c.l.b16 %v351
        %v579 = vunpack.c.l.b16 %v352
        %v580 = vunpack.c.l.b16 %v353
        %v581 = vunpack.c.l.b16 %v354
        %v582 = vunpack.c.l.b16 %v355
        %v583 = vunpack.c.l.b16 %v356
        %v584 = vunpack.c.l.b16 %v357
        %v585 = vunpack.c.l.b16 %v358
        %v586 = vunpack.c.l.b16 %v359
        %v587 = vunpack.c.l.b16 %v360
        %v588 = vunpack.c.l.b16 %v361
        %v589 = vunpack.c.l.b16 %v362
        %v590 = vunpack.c.l.b16 %v363
        %v591 = vunpack.c.l.b16 %v364
        %v592 = vunpack.c.l.b16 %v365
        %v593 = vunpack.c.l.b16 %v366
        %v594 = vunpack.c.l.b16 %v367
        %v595 = vunpack.c.l.b16 %v368
        %v596 = vunpack.c.l.b16 %v369
        %v597 = vunpack.c.l.b16 %v370
        %v598 = vunpack.c.l.b16 %v371
        %v599 = vunpack.c.l.b16 %v372
        %v600 = vunpack.c.l.b16 %v373
        %v601 = vunpack.c.l.b16 %v374
        %v602 = vunpack.c.l.b16 %v375
        %v603 = vunpack.c.l.b16 %v376
        %v604 = vunpack.c.l.b16 %v377
        %v605 = vunpack.c.l.b16 %v378
        %v606 = vunpack.c.l.b16 %v379
        %v607 = vunpack.c.l.b16 %v380
        %v608 = vunpack.c.l.b16 %v381
        %v609 = vunpack.c.l.b16 %v382
        %v610 = vunpack.c.l.b16 %v383
        %v611 = vunpack.c.l.b16 %v384
        %v612 = vunpack.c.l.b16 %v385
        %v613 = vunpack.c.l.b16 %v386
        %v614 = vunpack.c.l.b16 %v387
        %v615 = vunpack.c.l.b16 %v388
        %v616 = vunpack.c.l.b16 %v389
        %v617 = vunpack.c.l.b16 %v390
        %v618 = vunpack.c.l.b16 %v391
        %v619 = vunpack.c.l.b16 %v392
        %v620 = vunpack.c.l.b16 %v393
        %v621 = vunpack.c.l.b16 %v394
        %v622 = vpack.c.b16 %v525, %v524
        %v623 = vpack.c.b16 %v527, %v526
        %v624 = vpack.c.b16 %v529, %v528
        %v625 = vpack.c.b16 %v531, %v530
        %v626 = vpack.c.b16 %v533, %v532
        %v627 = vpack.c.b16 %v535, %v534
        %v628 = vpack.c.b16 %v537, %v536
        %v629 = vpack.c.b16 %v539, %v538
        %v630 = vpack.c.b16 %v541, %v540
        %v631 = vpack.c.b16 %v543, %v542
        %v632 = vpack.c.b16 %v545, %v544
        %v633 = vpack.c.b16 %v547, %v546
        %v634 = vpack.c.b16 %v549, %v548
        %v635 = vpack.c.b16 %v551, %v550
        %v636 = vpack.c.b16 %v553, %v552
        %v637 = vpack.c.b16 %v555, %v554
        %v638 = vpack.c.b16 %v557, %v556
        %v639 = vpack.c.b16 %v559, %v558
        %v640 = vpack.c.b16 %v561, %v560
        %v641 = vpack.c.b16 %v563, %v562
        %v642 = vpack.c.b16 %v565, %v564
        %v643 = vpack.c.b16 %v567, %v566
        %v644 = vpack.c.b16 %v569, %v568
        %v645 = vpack.c.b16 %v571, %v570
        %v646 = vpack.c.b16 %v573, %v572
        %v647 = vpack.c.b16 %v575, %v574
        %v648 = vpack.c.b16 %v577, %v576
        %v649 = vpack.c.b16 %v579, %v578
        %v650 = vpack.c.b16 %v581, %v580
        %v651 = vpack.c.b16 %v583, %v582
        %v652 = vpack.c.b16 %v585, %v584
        %v653 = vpack.c.b16 %v587, %v586
        %v654 = vpack.c.b16 %v589, %v588
        %v655 = vpack.c.b16 %v591, %v590
        %v656 = vpack.c.b16 %v593, %v592
        %v657 = vpack.c.b16 %v595, %v594
        %v658 = vpack.c.b16 %v597, %v596
        %v659 = vpack.c.b16 %v599, %v598
        %v660 = vpack.c.b16 %v601, %v600
        %v661 = vpack.c.b16 %v603, %v602
        %v662 = vpack.c.b16 %v605, %v604
        %v663 = vpack.c.b16 %v607, %v606
        %v664 = vpack.c.b16 %v609, %v608
        %v665 = vpack.c.b16 %v611, %v610
        %v666 = vpack.c.b16 %v613, %v612
        %v667 = vpack.c.b16 %v615, %v614
        %v668 = vpack.c.b16 %v617, %v616
        %v669 = vpack.c.b16 %v619, %v618
        %v670 = vpack.c.b16 %v621, %v620
        %vm720 = vcmask 130048
        %v722 = vsel %vm720, %v419, 0
        %724 = vmatprep.subr.bf16.mxu0 0
        %725 = vmatpush1.bf16.msra.mxu0 %v622
        %726 = vmatprep.subr.bf16.mxu0 0
        %727 = vmatpush1.bf16.msra.mxu0 %v623
        %728 = vmatprep.subr.bf16.mxu0 0
        %729 = vmatpush1.bf16.msra.mxu0 %v624
        %730 = vmatprep.subr.bf16.mxu0 0
        %731 = vmatpush1.bf16.msra.mxu0 %v625
        %732 = vmatprep.subr.bf16.mxu0 0
        %733 = vmatpush1.bf16.msra.mxu0 %v626
        %734 = vmatprep.subr.bf16.mxu0 0
        %735 = vmatpush1.bf16.msra.mxu0 %v627
        %736 = vmatprep.subr.bf16.mxu0 0
        %737 = vmatpush1.bf16.msra.mxu0 %v628
        %738 = vmatprep.subr.bf16.mxu0 0
        %739 = vmatpush1.bf16.msra.mxu0 %v629
        %740 = vmatprep.subr.bf16.mxu0 0
        %741 = vmatpush1.bf16.msra.mxu0 %v630
        %742 = vmatprep.subr.bf16.mxu0 0
        %743 = vmatpush1.bf16.msra.mxu0 %v631
        %744 = vmatprep.subr.bf16.mxu0 0
        %745 = vmatpush1.bf16.msra.mxu0 %v632
        %746 = vmatprep.subr.bf16.mxu0 0
        %747 = vmatpush1.bf16.msra.mxu0 %v633
        %748 = vmatprep.subr.bf16.mxu0 0
        %749 = vmatpush1.bf16.msra.mxu0 %v634
        %750 = vmatprep.subr.bf16.mxu0 0
        %751 = vmatpush1.bf16.msra.mxu0 %v635
        %752 = vmatprep.subr.bf16.mxu0 0
        %753 = vmatpush1.bf16.msra.mxu0 %v636
        %754 = vmatprep.subr.bf16.mxu0 0
        %755 = vmatpush1.bf16.msra.mxu0 %v637
        %756 = vmatprep.mubr.bf16.mxu0 %v414
        %757 = vmatmul.mubr.bf16.gmra.mrb[0].mxu0 %v413
        %v758 = vpop.f32.mrb[0].mxu0
        %v759 = vadd.f32 %v400, %v758
        %v760 = vpop.f32.mrb[0].mxu0
        %v761 = vpop.f32.mrb[0].mxu0
        %v762 = vpop.f32.mrb[0].mxu0
        %763 = vdwg.mxu0
        %764 = vmatprep.subr.bf16.mxu0 0
        %765 = vmatpush1.bf16.msra.mxu0 %v638
        %766 = vmatprep.subr.bf16.mxu0 0
        %767 = vmatpush1.bf16.msra.mxu0 %v639
        %768 = vmatprep.subr.bf16.mxu0 0
        %769 = vmatpush1.bf16.msra.mxu0 %v640
        %770 = vmatprep.subr.bf16.mxu0 0
        %771 = vmatpush1.bf16.msra.mxu0 %v641
        %772 = vmatprep.subr.bf16.mxu0 0
        %773 = vmatpush1.bf16.msra.mxu0 %v642
        %774 = vmatprep.subr.bf16.mxu0 0
        %775 = vmatpush1.bf16.msra.mxu0 %v643
        %776 = vmatprep.subr.bf16.mxu0 0
        %777 = vmatpush1.bf16.msra.mxu0 %v644
        %778 = vmatprep.subr.bf16.mxu0 0
        %779 = vmatpush1.bf16.msra.mxu0 %v645
        %780 = vmatprep.subr.bf16.mxu0 0
        %781 = vmatpush1.bf16.msra.mxu0 %v646
        %782 = vmatprep.subr.bf16.mxu0 0
        %783 = vmatpush1.bf16.msra.mxu0 %v647
        %784 = vmatprep.subr.bf16.mxu0 0
        %785 = vmatpush1.bf16.msra.mxu0 %v648
        %786 = vmatprep.subr.bf16.mxu0 0
        %787 = vmatpush1.bf16.msra.mxu0 %v649
        %788 = vmatprep.subr.bf16.mxu0 0
        %789 = vmatpush1.bf16.msra.mxu0 %v650
        %790 = vmatprep.subr.bf16.mxu0 0
        %791 = vmatpush1.bf16.msra.mxu0 %v651
        %792 = vmatprep.subr.bf16.mxu0 0
        %793 = vmatpush1.bf16.msra.mxu0 %v652
        %794 = vmatprep.subr.bf16.mxu0 0
        %795 = vmatpush1.bf16.msra.mxu0 %v653
        %796 = vmatprep.mubr.bf16.mxu0 %v416
        %797 = vmatmul.mubr.bf16.gmra.mrb[0].mxu0 %v415
        %v798 = vpop.f32.mrb[0].mxu0
        %v799 = vadd.f32 %v759, %v798
        %v800 = vpop.f32.mrb[0].mxu0
        %v801 = vpop.f32.mrb[0].mxu0
        %v802 = vpop.f32.mrb[0].mxu0
        %803 = vdwg.mxu0
        %804 = vmatprep.subr.bf16.mxu0 0
        %805 = vmatpush1.bf16.msra.mxu0 %v654
        %806 = vmatprep.subr.bf16.mxu0 0
        %807 = vmatpush1.bf16.msra.mxu0 %v655
        %808 = vmatprep.subr.bf16.mxu0 0
        %809 = vmatpush1.bf16.msra.mxu0 %v656
        %810 = vmatprep.subr.bf16.mxu0 0
        %811 = vmatpush1.bf16.msra.mxu0 %v657
        %812 = vmatprep.subr.bf16.mxu0 0
        %813 = vmatpush1.bf16.msra.mxu0 %v658
        %814 = vmatprep.subr.bf16.mxu0 0
        %815 = vmatpush1.bf16.msra.mxu0 %v659
        %816 = vmatprep.subr.bf16.mxu0 0
        %817 = vmatpush1.bf16.msra.mxu0 %v660
        %818 = vmatprep.subr.bf16.mxu0 0
        %819 = vmatpush1.bf16.msra.mxu0 %v661
        %820 = vmatprep.subr.bf16.mxu0 0
        %821 = vmatpush1.bf16.msra.mxu0 %v662
        %822 = vmatprep.subr.bf16.mxu0 0
        %823 = vmatpush1.bf16.msra.mxu0 %v663
        %824 = vmatprep.subr.bf16.mxu0 0
        %825 = vmatpush1.bf16.msra.mxu0 %v664
        %826 = vmatprep.subr.bf16.mxu0 0
        %827 = vmatpush1.bf16.msra.mxu0 %v665
        %828 = vmatprep.subr.bf16.mxu0 0
        %829 = vmatpush1.bf16.msra.mxu0 %v666
        %830 = vmatprep.subr.bf16.mxu0 0
        %831 = vmatpush1.bf16.msra.mxu0 %v667
        %832 = vmatprep.subr.bf16.mxu0 0
        %833 = vmatpush1.bf16.msra.mxu0 %v668
        %834 = vmatprep.subr.bf16.mxu0 0
        %835 = vmatpush1.bf16.msra.mxu0 %v669
        %836 = vmatprep.mubr.bf16.mxu0 %v418
        %837 = vmatmul.mubr.bf16.gmra.mrb[0].mxu0 %v417
        %v838 = vpop.f32.mrb[0].mxu0
        %v839 = vadd.f32 %v799, %v838
        %v840 = vpop.f32.mrb[0].mxu0
        %v841 = vpop.f32.mrb[0].mxu0
        %v842 = vpop.f32.mrb[0].mxu0
        %843 = vdwg.mxu0
        %844 = vmatprep.subr.bf16.mxu0 0
        %845 = vmatpush1.bf16.msra.mxu0 %v670
        %846 = vmatprep.subr.bf16.mxu0 0
        %847 = vmatpush1.bf16.msra.mxu0 0
        %848 = vmatprep.subr.bf16.mxu0 0
        %849 = vmatpush1.bf16.msra.mxu0 0
        %850 = vmatprep.subr.bf16.mxu0 0
        %851 = vmatpush1.bf16.msra.mxu0 0
        %852 = vmatprep.subr.bf16.mxu0 0
        %853 = vmatpush1.bf16.msra.mxu0 0
        %854 = vmatprep.subr.bf16.mxu0 0
        %855 = vmatpush1.bf16.msra.mxu0 0
        %856 = vmatprep.subr.bf16.mxu0 0
        %857 = vmatpush1.bf16.msra.mxu0 0
        %858 = vmatprep.subr.bf16.mxu0 0
        %859 = vmatpush1.bf16.msra.mxu0 0
        %860 = vmatprep.subr.bf16.mxu0 0
        %861 = vmatpush1.bf16.msra.mxu0 0
        %862 = vmatprep.subr.bf16.mxu0 0
        %863 = vmatpush1.bf16.msra.mxu0 0
        %864 = vmatprep.subr.bf16.mxu0 0
        %865 = vmatpush1.bf16.msra.mxu0 0
        %866 = vmatprep.subr.bf16.mxu0 0
        %867 = vmatpush1.bf16.msra.mxu0 0
        %868 = vmatprep.subr.bf16.mxu0 0
        %869 = vmatpush1.bf16.msra.mxu0 0
        %870 = vmatprep.subr.bf16.mxu0 0
        %871 = vmatpush1.bf16.msra.mxu0 0
        %872 = vmatprep.subr.bf16.mxu0 0
        %873 = vmatpush1.bf16.msra.mxu0 0
        %874 = vmatprep.subr.bf16.mxu0 0
        %875 = vmatpush1.bf16.msra.mxu0 0
        %876 = vmatprep.mubr.bf16.mxu0 0
        %877 = vmatmul.mubr.bf16.gmra.mrb[0].mxu0 %v722
        %v878 = vpop.f32.mrb[0].mxu0
        %v879 = vadd.f32 %v839, %v878
        %v880 = vpop.f32.mrb[0].mxu0
        %v881 = vpop.f32.mrb[0].mxu0
        %v882 = vpop.f32.mrb[0].mxu0
        %883 = vdwg.mxu0
        %v884 = vmax.f32 %v879, 0.0
        %v885 = vpack.c.bf16 %v884, %v884
        %v886 = vld [vmem:[%s3] sm:$0xf]
        %v887 = vld [vmem:[%s3 + $0x4] sm:$0xf]
        %v888 = vld [vmem:[%s3 + $0x8] sm:$0xf]
        %v889 = vld [vmem:[%s3 + $0xc] sm:$0xf]
        %v890 = vld [vmem:[%s3 + $0x10] sm:$0xf]
        %v891 = vld [vmem:[%s3 + $0x14] sm:$0xf]
        %v892 = vld [vmem:[%s3 + $0x18] sm:$0xf]
        %v893 = vld [vmem:[%s3 + $0x1c] sm:$0xf]
        %v894 = vld [vmem:[%s3 + $0x20] sm:$0xf]
        %v895 = vld [vmem:[%s3 + $0x24] sm:$0xf]
        %v896 = vld [vmem:[%s3 + $0x28] sm:$0xf]
        %v897 = vld [vmem:[%s3 + $0x2c] sm:$0xf]
        %v898 = vld [vmem:[%s3 + $0x30] sm:$0xf]
        %v899 = vld [vmem:[%s3 + $0x34] sm:$0xf]
        %v900 = vld [vmem:[%s3 + $0x38] sm:$0xf]
        %v901 = vld [vmem:[%s3 + $0x3c] sm:$0xf]
        %v902 = vld [vmem:[%s4] sm:$0x1]
        %v904 = vlaneseq
        %v905 = vshrl.u32 %v904, 7
        %v906 = vsub.s32 0, %v905
        %v907 = vrot.slane %v902, %v906
        %v925 = vunpack.c.l.b16 %v886
        %v926 = vunpack.c.l.b16 %v887
        %v927 = vunpack.c.l.b16 %v888
        %v928 = vunpack.c.l.b16 %v889
        %v929 = vunpack.c.l.b16 %v890
        %v930 = vunpack.c.l.b16 %v891
        %v931 = vunpack.c.l.b16 %v892
        %v932 = vunpack.c.l.b16 %v893
        %v933 = vunpack.c.l.b16 %v894
        %v934 = vunpack.c.l.b16 %v895
        %v935 = vunpack.c.l.b16 %v896
        %v936 = vunpack.c.l.b16 %v897
        %v937 = vunpack.c.l.b16 %v898
        %v938 = vunpack.c.l.b16 %v899
        %v939 = vunpack.c.l.b16 %v900
        %v940 = vunpack.c.l.b16 %v901
        %v941 = vpack.c.b16 %v926, %v925
        %v942 = vpack.c.b16 %v928, %v927
        %v943 = vpack.c.b16 %v930, %v929
        %v944 = vpack.c.b16 %v932, %v931
        %v945 = vpack.c.b16 %v934, %v933
        %v946 = vpack.c.b16 %v936, %v935
        %v947 = vpack.c.b16 %v938, %v937
        %v948 = vpack.c.b16 %v940, %v939
        %957 = vmatprep.subr.bf16.mxu0 0
        %958 = vmatpush1.bf16.msra.mxu0 %v941
        %959 = vmatprep.subr.bf16.mxu0 0
        %960 = vmatpush1.bf16.msra.mxu0 %v942
        %961 = vmatprep.subr.bf16.mxu0 0
        %962 = vmatpush1.bf16.msra.mxu0 %v943
        %963 = vmatprep.subr.bf16.mxu0 0
        %964 = vmatpush1.bf16.msra.mxu0 %v944
        %965 = vmatprep.subr.bf16.mxu0 0
        %966 = vmatpush1.bf16.msra.mxu0 %v945
        %967 = vmatprep.subr.bf16.mxu0 0
        %968 = vmatpush1.bf16.msra.mxu0 %v946
        %969 = vmatprep.subr.bf16.mxu0 0
        %970 = vmatpush1.bf16.msra.mxu0 %v947
        %971 = vmatprep.subr.bf16.mxu0 0
        %972 = vmatpush1.bf16.msra.mxu0 %v948
        %973 = vmatprep.subr.bf16.mxu0 0
        %974 = vmatpush1.bf16.msra.mxu0 0
        %975 = vmatprep.subr.bf16.mxu0 0
        %976 = vmatpush1.bf16.msra.mxu0 0
        %977 = vmatprep.subr.bf16.mxu0 0
        %978 = vmatpush1.bf16.msra.mxu0 0
        %979 = vmatprep.subr.bf16.mxu0 0
        %980 = vmatpush1.bf16.msra.mxu0 0
        %981 = vmatprep.subr.bf16.mxu0 0
        %982 = vmatpush1.bf16.msra.mxu0 0
        %983 = vmatprep.subr.bf16.mxu0 0
        %984 = vmatpush1.bf16.msra.mxu0 0
        %985 = vmatprep.subr.bf16.mxu0 0
        %986 = vmatpush1.bf16.msra.mxu0 0
        %987 = vmatprep.subr.bf16.mxu0 0
        %988 = vmatpush1.bf16.msra.mxu0 0
        %989 = vmatprep.mubr.bf16.mxu0 0
        %990 = vmatmul.mubr.bf16.gmra.mrb[0].mxu0 %v885
        %v991 = vpop.f32.mrb[0].mxu0
        %v992 = vadd.f32 %v907, %v991
        %v993 = vpop.f32.mrb[0].mxu0
        %v994 = vpop.f32.mrb[0].mxu0
        %v995 = vpop.f32.mrb[0].mxu0
        %996 = vdwg.mxu0
        %v997 = vmax.f32 %v992, 0.0
        %v998 = vpack.c.bf16 %v997, %v997
        %v999 = vld [vmem:[%s5] sm:$0xf]
        %v1000 = vld [vmem:[%s5 + $0x4] sm:$0xf]
        %v1001 = vld [vmem:[%s5 + $0x8] sm:$0xf]
        %v1002 = vld [vmem:[%s5 + $0xc] sm:$0xf]
        %v1003 = vld [vmem:[%s5 + $0x10] sm:$0xf]
        %v1004 = vld [vmem:[%s5 + $0x14] sm:$0xf]
        %v1005 = vld [vmem:[%s5 + $0x18] sm:$0xf]
        %v1006 = vld [vmem:[%s5 + $0x1c] sm:$0xf]
        %v1007 = vld [vmem:[%s6] sm:$0x1]
        %v1009 = vlaneseq
        %v1010 = vshrl.u32 %v1009, 7
        %v1011 = vsub.s32 0, %v1010
        %v1012 = vrot.slane %v1007, %v1011
        %v1022 = vunpack.c.l.b16 %v999
        %v1023 = vunpack.c.l.b16 %v1000
        %v1024 = vunpack.c.l.b16 %v1001
        %v1025 = vunpack.c.l.b16 %v1002
        %v1026 = vunpack.c.l.b16 %v1003
        %v1027 = vunpack.c.l.b16 %v1004
        %v1028 = vunpack.c.l.b16 %v1005
        %v1029 = vunpack.c.l.b16 %v1006
        %v1030 = vpack.c.b16 %v1023, %v1022
        %v1031 = vpack.c.b16 %v1025, %v1024
        %v1032 = vpack.c.b16 %v1027, %v1026
        %v1033 = vpack.c.b16 %v1029, %v1028
        %vm1038 = vcmask 523264
        %v1040 = vsel %vm1038, %v998, 0
        %1042 = vmatprep.subr.bf16.mxu0 0
        %1043 = vmatpush1.bf16.msra.mxu0 %v1030
        %1044 = vmatprep.subr.bf16.mxu0 0
        %1045 = vmatpush1.bf16.msra.mxu0 %v1031
        %1046 = vmatprep.subr.bf16.mxu0 0
        %1047 = vmatpush1.bf16.msra.mxu0 %v1032
        %1048 = vmatprep.subr.bf16.mxu0 0
        %1049 = vmatpush1.bf16.msra.mxu0 %v1033
        %1050 = vmatprep.subr.bf16.mxu0 0
        %1051 = vmatpush1.bf16.msra.mxu0 0
        %1052 = vmatprep.subr.bf16.mxu0 0
        %1053 = vmatpush1.bf16.msra.mxu0 0
        %1054 = vmatprep.subr.bf16.mxu0 0
        %1055 = vmatpush1.bf16.msra.mxu0 0
        %1056 = vmatprep.subr.bf16.mxu0 0
        %1057 = vmatpush1.bf16.msra.mxu0 0
        %1058 = vmatprep.subr.bf16.mxu0 0
        %1059 = vmatpush1.bf16.msra.mxu0 0
        %1060 = vmatprep.subr.bf16.mxu0 0
        %1061 = vmatpush1.bf16.msra.mxu0 0
        %1062 = vmatprep.subr.bf16.mxu0 0
        %1063 = vmatpush1.bf16.msra.mxu0 0
        %1064 = vmatprep.subr.bf16.mxu0 0
        %1065 = vmatpush1.bf16.msra.mxu0 0
        %1066 = vmatprep.subr.bf16.mxu0 0
        %1067 = vmatpush1.bf16.msra.mxu0 0
        %1068 = vmatprep.subr.bf16.mxu0 0
        %1069 = vmatpush1.bf16.msra.mxu0 0
        %1070 = vmatprep.subr.bf16.mxu0 0
        %1071 = vmatpush1.bf16.msra.mxu0 0
        %1072 = vmatprep.subr.bf16.mxu0 0
        %1073 = vmatpush1.bf16.msra.mxu0 0
        %1074 = vmatprep.mubr.bf16.mxu0 0
        %1075 = vmatmul.mubr.bf16.gmra.mrb[0].mxu0 %v1040
        %v1076 = vpop.f32.mrb[0].mxu0
        %v1077 = vadd.f32 %v1012, %v1076
        %v1078 = vpop.f32.mrb[0].mxu0
        %v1079 = vpop.f32.mrb[0].mxu0
        %v1080 = vpop.f32.mrb[0].mxu0
        %1081 = vdwg.mxu0
        %vm1082 = vcmask 80896
        %v1083 = vsel %vm1082, %v1077, -inf
        %1084 = vmax.xlane.f32.xlu0 %v1083
        %v1085 = vpop.xlane.xlu0 %1084
        %v1086 = vsub.f32 %v1077, %v1085
        %v1087 = vmul.f32 %v1086, 1.442695
        %v1088 = vpow.pop %v1087
        %v1089 = vsel %vm1082, %v1088, 0.0
        %1090 = vadd.xlane.f32.xlu0 %v1089
        %v1091 = vpop.xlane.xlu0 %1090
        %v1092 = vlog2.pop %v1091
        %v1093 = vmul.f32 %v1092, 0.6931472
        %v1094 = vsub.f32 %v1086, %v1093
        %1095 = vst.msk [vmem:[%s291] sm:$0xff] %vm1082, %v1094
        %p1096 = scmp.lt.s32.totalorder %s19, 3
        %s1097 = scalar_select %p1096, %s19, 3
        %s1098 = smul.addr %s1097, 8
        %s1099 = scalar_lea.vmem %s7, %s1098
        // Predicated region
        $region53: #{tpu_custom_call.1} parent=47 // pred_check
          %p1100 = pneg %p189
        $region54: #{tpu_custom_call.1} parent=47 // pred_check_branch
          %1102 = sbr.rel (%p1100) target = $region56
        $region55: #{tpu_custom_call.1} parent=47 // pred_region
          _
        $region56: #{tpu_custom_call.1} parent=47 // pred_fallthru
          _
      $region48: #{tpu_custom_call.1} parent=5 // pred_fallthru
        _
      %p1103 = scmp.le.s32.totalorder 2, %s14
      // Predicated region
      $region57: #{tpu_custom_call.1} parent=5 // pred_check
        %p1104 = pneg %p1103
      $region58: #{tpu_custom_call.1} parent=5 // pred_check_branch
        %1106 = sbr.rel (%p1104) target = $region60
      $region59: #{tpu_custom_call.1} parent=5 // pred_region
        %s1107 = ssub.s32 %s14, 2
        // Predicated region
        $region61: #{tpu_custom_call.1} parent=59 // pred_check
          %p1108 = pneg %p195
        $region62: #{tpu_custom_call.1} parent=59 // pred_check_branch
          %1110 = sbr.rel (%p1108) target = $region64
        $region63: #{tpu_custom_call.1} parent=59 // pred_region
          %p1111 = scmp.lt.s32.totalorder %s20, 3
          %s1112 = scalar_select %p1111, %s20, 3
          %s1113 = smul.addr %s1112, 8
          %s1114 = scalar_lea.vmem %s7, %s1113
        $region64: #{tpu_custom_call.1} parent=59 // pred_fallthru
          _
      $region60: #{tpu_custom_call.1} parent=5 // pred_fallthru
        _
    $region6: #{tpu_custom_call.1} parent=1 // loop_footer
      %s18 = sadd.s32 1, %s14
    $region7: #{tpu_custom_call.1} parent=1 // loop_footer_branch
      %13 = sbr.rel target = $region3
    $region8: #{tpu_custom_call.1} parent=1 // loop_exit
      _
    %1115 = vsyncpa [#allocation3], 1
    %s1116 = scalar_lea.sflag [#allocation3], 1
    %1117 = vsyncpa %s1116, 1

</llo_original>
